<compile_context>
chip_gen: v6e
topology: v6e:2x2x1
jax: 0.10.0
libtpu: 0.0.40
codegen_flags: <defaults>
</compile_context>

<pallas_src>
import functools

import jax
import jax.numpy as jnp
from jax.experimental import pallas as pl
from jax.experimental.pallas import tpu as pltpu


# ----------------------------------------------------------------------------
# Fused kernel: ReLU + depthwise 3x3 dilated conv + all 1x1 convs + BN + concat
# One (image, row-tile) per grid step.
# ----------------------------------------------------------------------------
def _aspp_kernel(band_ref, halo_ref, bias3_ref, wdw_ref, w1_ref, wpw_ref,
                 wc_ref, b12_ref, o_ref, *, TH, W, p, d):
    # band_ref  : (1, TH,  W+2p, C_in) bf16  padded rows [h*TH, h*TH+TH)   (pre-ReLU)
    # halo_ref  : (1, 2p,  W+2p, C_in) bf16  padded rows [h*TH+TH, h*TH+TH+2p)
    # bias3_ref : (1, 1, C_out)   f32  GAP-branch term pre-folded with final BN
    # wdw_ref   : (9, C_in)       f32  depthwise taps, row = 3*kh + kw
    # w1_ref    : (C_in, C_out)   bf16 branch-1 1x1 weight (BN scale folded in)
    # wpw_ref   : (C_in, C_out)   bf16 pointwise-after-dw weight (BN scale folded)
    # wc_ref    : (2*C_out, C_out) bf16 stacked concat-conv weight (BN scale folded)
    # b12_ref   : (2, C_out)      f32  [b1, b2] folded BN biases
    # o_ref     : (1, C_out, TH*W) f32 lane-dense output tile
    f32 = jnp.float32

    # ReLU applied ONCE to the whole padded row window (band + bottom halo).
    # TODO(synk): replace the concat with a manual (pl.ANY + make_async_copy)
    # overlapping band DMA so the halo never needs a separate HBM array.
    win = jnp.concatenate([band_ref[0], halo_ref[0]], axis=0).astype(f32)
    win = jnp.maximum(win, 0.0)                       # (TH+2p, W+2p, C_in)
    C_in = win.shape[-1]
    R = TH * W

    # Hoist the 3 (misaligned) column shifts out of the 3x3 tap loop.
    cols = [win[:, j * d:j * d + W, :] for j in range(3)]

    # ---- depthwise 3x3 dilated conv (groups = C_in), f32 on the VPU ---------
    # TODO(synk): packed-bf16 taps on v6e/v7x would roughly halve the VALU work.
    acc = jnp.zeros((TH, W, C_in), f32)
    for i in range(3):
        for j in range(3):
            acc = acc + cols[j][i * d:i * d + TH] * wdw_ref[3 * i + j:3 * i + j + 1, :]
    dw = acc.reshape(R, C_in)

    # Un-padded pixels of this tile == centre-tap column slice (p == d).
    xr = cols[1][p:p + TH].reshape(R, C_in)

    b1 = b12_ref[0:1, :]
    b2 = b12_ref[1:2, :]

    # ---- 1x1 convs.  Weights arrive bf16 (cheap DMA) and are upcast so the
    # dots are F32 x F32 = F32 (backend rejects BF16xBF16=F32 dots). ----------
    x1 = jnp.dot(xr, w1_ref[...].astype(f32), preferred_element_type=f32) + b1
    x2 = jnp.dot(dw, wpw_ref[...].astype(f32), preferred_element_type=f32) + b2

    # concat([x1, x2]) -> ReLU -> single K = 2*C_out matmul; GAP branch and the
    # final BN bias were pre-folded into bias3.
    cat = jnp.concatenate([jnp.maximum(x1, 0.0), jnp.maximum(x2, 0.0)], axis=-1)
    out = jnp.dot(cat, wc_ref[...].astype(f32), preferred_element_type=f32)
    out = out + bias3_ref[0]

    # Lane-dense store: channels on sublanes, flattened spatial rows on lanes.
    # TODO(synk): when C_out % 128 == 0, store un-transposed (R, C_out) and do
    # one XLA transpose outside instead (drops the per-tile XLU transpose).
    o_ref[0] = out.T


# ----------------------------------------------------------------------------
# VMEM-budgeted row-tile selection
# ----------------------------------------------------------------------------
def _tile_vmem_bytes(TH, W, C_in, C_out, p):
    """Rough per-grid-step VMEM working-set estimate in bytes."""
    Wp = W + 2 * p
    R = TH * W
    band = TH * Wp * C_in * 2                      # bf16 band (double-buffered)
    halo = 2 * p * Wp * C_in * 2                   # bf16 halo (double-buffered)
    out_t = C_out * R * 4                          # f32 output tile (double-buffered)
    win = (TH + 2 * p) * Wp * C_in * 4             # ReLU'd f32 window
    acc = R * C_in * 4                             # depthwise accumulator
    mats = 5 * R * C_out * 4                       # x1/x2 (+relu) + concat buffers
    wts = 2 * ((2 * C_in * C_out + 2 * C_out * C_out) * 2 + 9 * C_in * 4 + 2 * C_out * 4)
    return 2 * (band + halo + out_t) + win + acc + mats + wts


def _pick_block_h(H, W, C_in, C_out, p, budget_bytes):
    if _tile_vmem_bytes(H, W, C_in, C_out, p) <= budget_bytes:
        return H
    block_h = H
    for th in (512, 256, 128, 64, 32, 16, 8, 4, 2, 1):
        if th < H and H % th == 0 and (th * W) % 128 == 0:
            block_h = th
            if _tile_vmem_bytes(th, W, C_in, C_out, p) <= budget_bytes:
                break
    return block_h


# ----------------------------------------------------------------------------
# Wrapper
# ----------------------------------------------------------------------------
def aspp_pallas(x_nchw, params, padding, dilation, eps=1e-5, block_h=None,
                vmem_budget_bytes=24 * 1024 * 1024):
    assert padding == dilation, "ASPP concat requires 'same' output (padding == dilation)"
    N, C_in, H, W = x_nchw.shape
    C_out = params["w1"].shape[1]
    p = d = padding

    # Row tile derived from a VMEM budget (default is conservative enough for
    # v7x's 64 MiB/TC as well as v5e/v6e default scoped limits).
    if block_h is None:
        block_h = _pick_block_h(H, W, C_in, C_out, p, vmem_budget_bytes)
    TH = block_h
    assert H % TH == 0, "block_h must divide H"
    assert TH == H or (TH * W) % 128 == 0, "row tile must keep the output lane-dense"
    nT = H // TH
    R = TH * W
    # TODO(synk): on v7x prefer an even N*nT so the two TensorCores split evenly.

    f32, bf16 = jnp.float32, jnp.bfloat16

    x = jnp.transpose(x_nchw, (0, 2, 3, 1)).astype(f32)                 # NHWC f32
    # bf16 activation transfer: halves the dominant HBM stream into the kernel.
    xp = jnp.pad(x.astype(bf16), ((0, 0), (p, p), (p, p), (0, 0)))
    Hp, Wp = H + 2 * p, W + 2 * p
    # TODO(synk): build the zero borders in VMEM (manual DMA of the raw input)
    # to remove this padded HBM copy and the halo stack below.

    # Bottom halo rows per row-tile (tile h needs padded rows [h*TH, h*TH+TH+2p)).
    halo = jnp.stack(
        [xp[:, (h + 1) * TH:(h + 1) * TH + 2 * p] for h in range(nT)], axis=1)
    halo = halo.reshape(N * nT, 2 * p, Wp, C_in)

    # Fold inference-mode BatchNorm into per-channel scale/bias.
    def fold(bn):
        g, b, m, v = bn
        s = g / jnp.sqrt(v + eps)
        return s.reshape(1, -1), (b - m * s).reshape(1, -1)

    s1, b1 = fold(params["bn1"])
    s2, b2 = fold(params["bn2"])
    s3, b3 = fold(params["bn3"])
    sc, bc = fold(params["bn4"])

    # BN scales folded into the (bf16) weights; concat-conv weight stacked.
    w1 = (params["w1"] * s1).astype(bf16)                                # (C_in, C_out)
    wpw = (params["w_pw"] * s2).astype(bf16)                             # (C_in, C_out)
    wc12 = (params["w_cat"][:2 * C_out] * sc).astype(bf16)               # (2*C_out, C_out)
    wc3 = params["w_cat"][2 * C_out:]                                    # (C_out, C_out) f32
    b12 = jnp.concatenate([b1, b2], axis=0)                              # (2, C_out)

    # Branch 3 (GAP): ReLU -> global avg pool -> (bilinear up of 1x1 == broadcast)
    # -> 1x1 conv -> BN -> ReLU -> its row of the concat conv.  Spatially
    # constant, so pre-fold its contribution with the final BN into a bias.
    gap = jnp.mean(jnp.maximum(x, 0.0), axis=(1, 2))                     # (N, C_in)
    x3 = gap @ params["w_gap"] * s3 + b3                                 # (N, C_out)
    bias3 = (jnp.maximum(x3, 0.0) @ wc3 * sc + bc).reshape(N, 1, C_out)  # (N, 1, C_out)

    kernel = functools.partial(_aspp_kernel, TH=TH, W=W, p=p, d=d)

    out = pl.pallas_call(
        kernel,
        out_shape=jax.ShapeDtypeStruct((N, C_out, H * W), f32),
        grid=(N, nT),
        in_specs=[
            pl.BlockSpec((1, TH, Wp, C_in), lambda n, h: (n, h, 0, 0)),              # band (bf16)
            pl.BlockSpec((1, 2 * p, Wp, C_in), lambda n, h: (n * nT + h, 0, 0, 0)),  # halo (bf16)
            pl.BlockSpec((1, 1, C_out), lambda n, h: (n, 0, 0)),                     # bias3
            pl.BlockSpec((9, C_in), lambda n, h: (0, 0)),                            # w_dw (f32)
            pl.BlockSpec((C_in, C_out), lambda n, h: (0, 0)),                        # w1 (bf16)
            pl.BlockSpec((C_in, C_out), lambda n, h: (0, 0)),                        # w_pw (bf16)
            pl.BlockSpec((2 * C_out, C_out), lambda n, h: (0, 0)),                   # wc stacked (bf16)
            pl.BlockSpec((2, C_out), lambda n, h: (0, 0)),                           # b12
        ],
        out_specs=pl.BlockSpec((1, C_out, R), lambda n, h: (n, 0, h)),
        compiler_params=pltpu.CompilerParams(
            dimension_semantics=("parallel", "parallel")),
    )(xp, halo, bias3, params["w_dw"], w1, wpw, wc12, b12)

    return out.reshape(N, C_out, H, W)                                   # NCHW, free reshape


# ----------------------------------------------------------------------------
# Deterministic parameter init (shapes from ASPP.__init__)
# ----------------------------------------------------------------------------
def init_params(key, C_in, C_out):
    ks = jax.random.split(key, 9)

    def bn(k, c):
        k1, k2, k3, k4 = jax.random.split(k, 4)
        gamma = 1.0 + 0.1 * jax.random.normal(k1, (c,), jnp.float32)
        beta = 0.1 * jax.random.normal(k2, (c,), jnp.float32)
        mean = 0.1 * jax.random.normal(k3, (c,), jnp.float32)
        var = jax.random.uniform(k4, (c,), jnp.float32, minval=0.5, maxval=1.5)
        return (gamma, beta, mean, var)

    return dict(
        w1=0.2 * jax.random.normal(ks[0], (C_in, C_out), jnp.float32),       # 1x1 conv
        bn1=bn(ks[1], C_out),
        w_dw=0.2 * jax.random.normal(ks[2], (9, C_in), jnp.float32),         # depthwise 3x3, row=3*kh+kw
        w_pw=0.2 * jax.random.normal(ks[3], (C_in, C_out), jnp.float32),     # 1x1 conv after depthwise
        bn2=bn(ks[4], C_out),
        w_gap=0.2 * jax.random.normal(ks[5], (C_in, C_out), jnp.float32),    # 1x1 conv after GAP
        bn3=bn(ks[6], C_out),
        w_cat=0.2 * jax.random.normal(ks[7], (3 * C_out, C_out), jnp.float32),
        bn4=bn(ks[8], C_out),
    )


# ----------------------------------------------------------------------------
# Pure-JAX reference (NCHW, mirrors the PyTorch forward, eval-mode BN, all f32)
# ----------------------------------------------------------------------------
def reference_aspp(x, params, p, d, eps=1e-5):
    relu = lambda v: jnp.maximum(v, 0.0)

    def bn(v, stats):
        g, b, m, var = stats
        g, b, m, var = (t[None, :, None, None] for t in (g, b, m, var))
        return (v - m) / jnp.sqrt(var + eps) * g + b

    def conv1x1(v, w):
        return jnp.einsum("nchw,cd->ndhw", v, w)

    C_in = x.shape[1]
    C_out = params["w1"].shape[1]
    xr = relu(x)

    x1 = bn(conv1x1(xr, params["w1"]), params["bn1"])

    wdw_t = jnp.transpose(params["w_dw"].reshape(3, 3, C_in), (2, 0, 1))[:, None, :, :]
    dw = jax.lax.conv_general_dilated(
        xr, wdw_t, window_strides=(1, 1), padding=((p, p), (p, p)),
        rhs_dilation=(d, d), dimension_numbers=("NCHW", "OIHW", "NCHW"),
        feature_group_count=C_in)
    x2 = bn(conv1x1(dw, params["w_pw"]), params["bn2"])

    gap = jnp.mean(xr, axis=(2, 3), keepdims=True)
    x3 = jnp.broadcast_to(gap, xr.shape)            # bilinear upsample of 1x1 == broadcast
    x3 = bn(conv1x1(x3, params["w_gap"]), params["bn3"])

    wc = params["w_cat"]
    x4 = (conv1x1(relu(x1), wc[:C_out]) + conv1x1(relu(x2), wc[C_out:2 * C_out])
          + conv1x1(relu(x3), wc[2 * C_out:]))
    return bn(x4, params["bn4"])


if __name__ == "__main__":
    key = jax.random.PRNGKey(0)
    kx, kp = jax.random.split(key)

    N, C_in, C_out, H, W = 2, 4, 8, 16, 16
    padding = dilation = 2

    x = jax.random.normal(kx, (N, C_in, H, W), jnp.float32)
    params = init_params(kp, C_in, C_out)

    ref = reference_aspp(x, params, padding, dilation)

    # tiled path (2 row tiles per image, exercises the halo machinery)
    out_tiled = jax.block_until_ready(aspp_pallas(x, params, padding, dilation, block_h=8))
    # default path (budget-derived tile -> one row tile per image at this size)
    out_full = jax.block_until_ready(aspp_pallas(x, params, padding, dilation))

    for out in (out_tiled, out_full):
        assert out.shape == (N, C_out, H, W)
        max_err = float(jnp.max(jnp.abs(out - ref)))
        assert jnp.allclose(out, ref, atol=2e-2, rtol=2e-2), f"max abs err = {max_err}"

    print("KERNEL_OK")
</pallas_src>

<mosaic_0001>
module attributes {stable_mosaic.version = 11 : i64} {
  func.func @_aspp_kernel(%arg0: i32, %arg1: i32, %arg2: memref<1x8x20x4xbf16, #tpu.memory_space<vmem>>, %arg3: memref<1x4x20x4xbf16, #tpu.memory_space<vmem>>, %arg4: memref<1x1x8xf32, #tpu.memory_space<vmem>>, %arg5: memref<9x4xf32, #tpu.memory_space<vmem>>, %arg6: memref<4x8xbf16, #tpu.memory_space<vmem>>, %arg7: memref<4x8xbf16, #tpu.memory_space<vmem>>, %arg8: memref<16x8xbf16, #tpu.memory_space<vmem>>, %arg9: memref<2x8xf32, #tpu.memory_space<vmem>>, %arg10: memref<1x8x128xf32, #tpu.memory_space<vmem>>) attributes {dimension_semantics = [#tpu.dimension_semantics<parallel>, #tpu.dimension_semantics<parallel>], iteration_bounds = array<i64: 2, 2>, scalar_prefetch = 0 : i64, scratch_operands = 0 : i64, tpu.core_type = #tpu.core_type<tc>, window_params = [{transform_indices = @transform_0, window_bounds = array<i64: 1, 8, 20, 4>}, {transform_indices = @transform_1, window_bounds = array<i64: 1, 4, 20, 4>}, {transform_indices = @transform_2, window_bounds = array<i64: 1, 1, 8>}, {pipeline_mode = #tpu.pipeline_mode<synchronous>, transform_indices = @transform_3, window_bounds = array<i64: 9, 4>}, {pipeline_mode = #tpu.pipeline_mode<synchronous>, transform_indices = @transform_4, window_bounds = array<i64: 4, 8>}, {pipeline_mode = #tpu.pipeline_mode<synchronous>, transform_indices = @transform_5, window_bounds = array<i64: 4, 8>}, {pipeline_mode = #tpu.pipeline_mode<synchronous>, transform_indices = @transform_6, window_bounds = array<i64: 16, 8>}, {pipeline_mode = #tpu.pipeline_mode<synchronous>, transform_indices = @transform_7, window_bounds = array<i64: 2, 8>}, {transform_indices = @transform_8, window_bounds = array<i64: 1, 8, 128>}]} {
    %c0 = arith.constant 0 : index
    %c0_0 = arith.constant 0 : index
    %c0_1 = arith.constant 0 : index
    %c0_2 = arith.constant 0 : index
    %0 = vector.load %arg2[%c0, %c0_0, %c0_1, %c0_2] : memref<1x8x20x4xbf16, #tpu.memory_space<vmem>>, vector<1x8x20x4xbf16>
    %1 = vector.shape_cast %0 : vector<1x8x20x4xbf16> to vector<8x20x4xbf16>
    %c0_3 = arith.constant 0 : index
    %c0_4 = arith.constant 0 : index
    %c0_5 = arith.constant 0 : index
    %c0_6 = arith.constant 0 : index
    %2 = vector.load %arg3[%c0_3, %c0_4, %c0_5, %c0_6] : memref<1x4x20x4xbf16, #tpu.memory_space<vmem>>, vector<1x4x20x4xbf16>
    %3 = vector.shape_cast %2 : vector<1x4x20x4xbf16> to vector<4x20x4xbf16>
    %4 = tpu.concatenate %1, %3 in 0 : vector<8x20x4xbf16>, vector<4x20x4xbf16> -> vector<12x20x4xbf16>
    %5 = arith.extf %4 : vector<12x20x4xbf16> to vector<12x20x4xf32>
    %cst = arith.constant 0.000000e+00 : f32
    %6 = vector.broadcast %cst : f32 to vector<12x20x4xf32>
    %7 = arith.maximumf %5, %6 : vector<12x20x4xf32>
    %8 = vector.extract_strided_slice %7 {offsets = [0, 0, 0], sizes = [12, 16, 4], strides = [1, 1, 1]} : vector<12x20x4xf32> to vector<12x16x4xf32>
    %9 = vector.extract_strided_slice %7 {offsets = [0, 2, 0], sizes = [12, 16, 4], strides = [1, 1, 1]} : vector<12x20x4xf32> to vector<12x16x4xf32>
    %10 = vector.extract_strided_slice %7 {offsets = [0, 4, 0], sizes = [12, 16, 4], strides = [1, 1, 1]} : vector<12x20x4xf32> to vector<12x16x4xf32>
    %cst_7 = arith.constant 0.000000e+00 : f32
    %11 = vector.broadcast %cst_7 : f32 to vector<8x16x4xf32>
    %12 = vector.extract_strided_slice %8 {offsets = [0, 0, 0], sizes = [8, 16, 4], strides = [1, 1, 1]} : vector<12x16x4xf32> to vector<8x16x4xf32>
    %c0_8 = arith.constant 0 : index
    %c0_9 = arith.constant 0 : index
    %13 = vector.load %arg5[%c0_8, %c0_9] : memref<9x4xf32, #tpu.memory_space<vmem>>, vector<1x4xf32>
    %14 = vector.shape_cast %13 : vector<1x4xf32> to vector<1x1x4xf32>
    %15 = vector.broadcast %14 : vector<1x1x4xf32> to vector<8x16x4xf32>
    %16 = arith.mulf %12, %15 : vector<8x16x4xf32>
    %17 = arith.addf %11, %16 : vector<8x16x4xf32>
    %18 = vector.extract_strided_slice %9 {offsets = [0, 0, 0], sizes = [8, 16, 4], strides = [1, 1, 1]} : vector<12x16x4xf32> to vector<8x16x4xf32>
    %c1 = arith.constant 1 : index
    %c0_10 = arith.constant 0 : index
    %19 = vector.load %arg5[%c1, %c0_10] : memref<9x4xf32, #tpu.memory_space<vmem>>, vector<1x4xf32>
    %20 = vector.shape_cast %19 : vector<1x4xf32> to vector<1x1x4xf32>
    %21 = vector.broadcast %20 : vector<1x1x4xf32> to vector<8x16x4xf32>
    %22 = arith.mulf %18, %21 : vector<8x16x4xf32>
    %23 = arith.addf %17, %22 : vector<8x16x4xf32>
    %24 = vector.extract_strided_slice %10 {offsets = [0, 0, 0], sizes = [8, 16, 4], strides = [1, 1, 1]} : vector<12x16x4xf32> to vector<8x16x4xf32>
    %c2 = arith.constant 2 : index
    %c0_11 = arith.constant 0 : index
    %25 = vector.load %arg5[%c2, %c0_11] : memref<9x4xf32, #tpu.memory_space<vmem>>, vector<1x4xf32>
    %26 = vector.shape_cast %25 : vector<1x4xf32> to vector<1x1x4xf32>
    %27 = vector.broadcast %26 : vector<1x1x4xf32> to vector<8x16x4xf32>
    %28 = arith.mulf %24, %27 : vector<8x16x4xf32>
    %29 = arith.addf %23, %28 : vector<8x16x4xf32>
    %30 = vector.extract_strided_slice %8 {offsets = [2, 0, 0], sizes = [8, 16, 4], strides = [1, 1, 1]} : vector<12x16x4xf32> to vector<8x16x4xf32>
    %c3 = arith.constant 3 : index
    %c0_12 = arith.constant 0 : index
    %31 = vector.load %arg5[%c3, %c0_12] : memref<9x4xf32, #tpu.memory_space<vmem>>, vector<1x4xf32>
    %32 = vector.shape_cast %31 : vector<1x4xf32> to vector<1x1x4xf32>
    %33 = vector.broadcast %32 : vector<1x1x4xf32> to vector<8x16x4xf32>
    %34 = arith.mulf %30, %33 : vector<8x16x4xf32>
    %35 = arith.addf %29, %34 : vector<8x16x4xf32>
    %36 = vector.extract_strided_slice %9 {offsets = [2, 0, 0], sizes = [8, 16, 4], strides = [1, 1, 1]} : vector<12x16x4xf32> to vector<8x16x4xf32>
    %c4 = arith.constant 4 : index
    %c0_13 = arith.constant 0 : index
    %37 = vector.load %arg5[%c4, %c0_13] : memref<9x4xf32, #tpu.memory_space<vmem>>, vector<1x4xf32>
    %38 = vector.shape_cast %37 : vector<1x4xf32> to vector<1x1x4xf32>
    %39 = vector.broadcast %38 : vector<1x1x4xf32> to vector<8x16x4xf32>
    %40 = arith.mulf %36, %39 : vector<8x16x4xf32>
    %41 = arith.addf %35, %40 : vector<8x16x4xf32>
    %42 = vector.extract_strided_slice %10 {offsets = [2, 0, 0], sizes = [8, 16, 4], strides = [1, 1, 1]} : vector<12x16x4xf32> to vector<8x16x4xf32>
    %c5 = arith.constant 5 : index
    %c0_14 = arith.constant 0 : index
    %43 = vector.load %arg5[%c5, %c0_14] : memref<9x4xf32, #tpu.memory_space<vmem>>, vector<1x4xf32>
    %44 = vector.shape_cast %43 : vector<1x4xf32> to vector<1x1x4xf32>
    %45 = vector.broadcast %44 : vector<1x1x4xf32> to vector<8x16x4xf32>
    %46 = arith.mulf %42, %45 : vector<8x16x4xf32>
    %47 = arith.addf %41, %46 : vector<8x16x4xf32>
    %48 = vector.extract_strided_slice %8 {offsets = [4, 0, 0], sizes = [8, 16, 4], strides = [1, 1, 1]} : vector<12x16x4xf32> to vector<8x16x4xf32>
    %c6 = arith.constant 6 : index
    %c0_15 = arith.constant 0 : index
    %49 = vector.load %arg5[%c6, %c0_15] : memref<9x4xf32, #tpu.memory_space<vmem>>, vector<1x4xf32>
    %50 = vector.shape_cast %49 : vector<1x4xf32> to vector<1x1x4xf32>
    %51 = vector.broadcast %50 : vector<1x1x4xf32> to vector<8x16x4xf32>
    %52 = arith.mulf %48, %51 : vector<8x16x4xf32>
    %53 = arith.addf %47, %52 : vector<8x16x4xf32>
    %54 = vector.extract_strided_slice %9 {offsets = [4, 0, 0], sizes = [8, 16, 4], strides = [1, 1, 1]} : vector<12x16x4xf32> to vector<8x16x4xf32>
    %c7 = arith.constant 7 : index
    %c0_16 = arith.constant 0 : index
    %55 = vector.load %arg5[%c7, %c0_16] : memref<9x4xf32, #tpu.memory_space<vmem>>, vector<1x4xf32>
    %56 = vector.shape_cast %55 : vector<1x4xf32> to vector<1x1x4xf32>
    %57 = vector.broadcast %56 : vector<1x1x4xf32> to vector<8x16x4xf32>
    %58 = arith.mulf %54, %57 : vector<8x16x4xf32>
    %59 = arith.addf %53, %58 : vector<8x16x4xf32>
    %60 = vector.extract_strided_slice %10 {offsets = [4, 0, 0], sizes = [8, 16, 4], strides = [1, 1, 1]} : vector<12x16x4xf32> to vector<8x16x4xf32>
    %c8 = arith.constant 8 : index
    %c0_17 = arith.constant 0 : index
    %61 = vector.load %arg5[%c8, %c0_17] : memref<9x4xf32, #tpu.memory_space<vmem>>, vector<1x4xf32>
    %62 = vector.shape_cast %61 : vector<1x4xf32> to vector<1x1x4xf32>
    %63 = vector.broadcast %62 : vector<1x1x4xf32> to vector<8x16x4xf32>
    %64 = arith.mulf %60, %63 : vector<8x16x4xf32>
    %65 = arith.addf %59, %64 : vector<8x16x4xf32>
    %66 = vector.shape_cast %65 : vector<8x16x4xf32> to vector<128x4xf32>
    %67 = vector.extract_strided_slice %9 {offsets = [2, 0, 0], sizes = [8, 16, 4], strides = [1, 1, 1]} : vector<12x16x4xf32> to vector<8x16x4xf32>
    %68 = vector.shape_cast %67 : vector<8x16x4xf32> to vector<128x4xf32>
    %c0_18 = arith.constant 0 : index
    %c0_19 = arith.constant 0 : index
    %69 = vector.load %arg9[%c0_18, %c0_19] : memref<2x8xf32, #tpu.memory_space<vmem>>, vector<1x8xf32>
    %c1_20 = arith.constant 1 : index
    %c0_21 = arith.constant 0 : index
    %70 = vector.load %arg9[%c1_20, %c0_21] : memref<2x8xf32, #tpu.memory_space<vmem>>, vector<1x8xf32>
    %c0_22 = arith.constant 0 : index
    %c0_23 = arith.constant 0 : index
    %71 = vector.load %arg6[%c0_22, %c0_23] : memref<4x8xbf16, #tpu.memory_space<vmem>>, vector<4x8xbf16>
    %72 = arith.extf %71 : vector<4x8xbf16> to vector<4x8xf32>
    %cst_24 = arith.constant dense<0.000000e+00> : vector<128x8xf32>
    %73 = tpu.matmul %68, %72, %cst_24 {dimension_numbers = #tpu.dot_dimension_numbers<[1], [0], [0], [1], [0, 0, 1, 1], [], []>} : vector<128x4xf32>, vector<4x8xf32>, vector<128x8xf32> -> vector<128x8xf32>
    %74 = vector.broadcast %69 : vector<1x8xf32> to vector<128x8xf32>
    %75 = arith.addf %73, %74 : vector<128x8xf32>
    %c0_25 = arith.constant 0 : index
    %c0_26 = arith.constant 0 : index
    %76 = vector.load %arg7[%c0_25, %c0_26] : memref<4x8xbf16, #tpu.memory_space<vmem>>, vector<4x8xbf16>
    %77 = arith.extf %76 : vector<4x8xbf16> to vector<4x8xf32>
    %cst_27 = arith.constant dense<0.000000e+00> : vector<128x8xf32>
    %78 = tpu.matmul %66, %77, %cst_27 {dimension_numbers = #tpu.dot_dimension_numbers<[1], [0], [0], [1], [0, 0, 1, 1], [], []>} : vector<128x4xf32>, vector<4x8xf32>, vector<128x8xf32> -> vector<128x8xf32>
    %79 = vector.broadcast %70 : vector<1x8xf32> to vector<128x8xf32>
    %80 = arith.addf %78, %79 : vector<128x8xf32>
    %cst_28 = arith.constant 0.000000e+00 : f32
    %81 = vector.broadcast %cst_28 : f32 to vector<128x8xf32>
    %82 = arith.maximumf %75, %81 : vector<128x8xf32>
    %cst_29 = arith.constant 0.000000e+00 : f32
    %83 = vector.broadcast %cst_29 : f32 to vector<128x8xf32>
    %84 = arith.maximumf %80, %83 : vector<128x8xf32>
    %85 = tpu.concatenate %82, %84 in 1 : vector<128x8xf32>, vector<128x8xf32> -> vector<128x16xf32>
    %c0_30 = arith.constant 0 : index
    %c0_31 = arith.constant 0 : index
    %86 = vector.load %arg8[%c0_30, %c0_31] : memref<16x8xbf16, #tpu.memory_space<vmem>>, vector<16x8xbf16>
    %87 = arith.extf %86 : vector<16x8xbf16> to vector<16x8xf32>
    %cst_32 = arith.constant dense<0.000000e+00> : vector<128x8xf32>
    %88 = tpu.matmul %85, %87, %cst_32 {dimension_numbers = #tpu.dot_dimension_numbers<[1], [0], [0], [1], [0, 0, 1, 1], [], []>} : vector<128x16xf32>, vector<16x8xf32>, vector<128x8xf32> -> vector<128x8xf32>
    %c0_33 = arith.constant 0 : index
    %c0_34 = arith.constant 0 : index
    %c0_35 = arith.constant 0 : index
    %89 = vector.load %arg4[%c0_33, %c0_34, %c0_35] : memref<1x1x8xf32, #tpu.memory_space<vmem>>, vector<1x1x8xf32>
    %90 = vector.shape_cast %89 : vector<1x1x8xf32> to vector<1x8xf32>
    %91 = vector.broadcast %90 : vector<1x8xf32> to vector<128x8xf32>
    %92 = arith.addf %88, %91 : vector<128x8xf32>
    %93 = tpu.transpose %92, [1, 0] : vector<128x8xf32> -> vector<8x128xf32>
    %c0_36 = arith.constant 0 : index
    %c0_37 = arith.constant 0 : index
    %c0_38 = arith.constant 0 : index
    %94 = vector.load %arg10[%c0_36, %c0_37, %c0_38] : memref<1x8x128xf32, #tpu.memory_space<vmem>>, vector<1x8x128xf32>
    %95 = vector.shape_cast %94 : vector<1x8x128xf32> to vector<8x128xf32>
    %96 = vector.shape_cast %93 : vector<8x128xf32> to vector<1x8x128xf32>
    tpu.vector_store %arg10[%c0_36, %c0_37, %c0_38], %96 {strides = array<i32>} : memref<1x8x128xf32, #tpu.memory_space<vmem>>, vector<1x8x128xf32>,
    return
  }
  func.func @transform_0(%arg0: i32, %arg1: i32) -> (i32, i32, i32, i32) {
    %c0_i32 = arith.constant 0 : i32
    %c0_i32_0 = arith.constant 0 : i32
    %c0_i32_1 = arith.constant 0 : i32
    return %arg0, %arg1, %c0_i32, %c0_i32_0 : i32, i32, i32, i32
  }
  func.func @transform_1(%arg0: i32, %arg1: i32) -> (i32, i32, i32, i32) {
    %c2_i32 = arith.constant 2 : i32
    %0 = arith.muli %arg0, %c2_i32 : i32
    %1 = arith.addi %0, %arg1 : i32
    %c0_i32 = arith.constant 0 : i32
    %c0_i32_0 = arith.constant 0 : i32
    %c0_i32_1 = arith.constant 0 : i32
    %c0_i32_2 = arith.constant 0 : i32
    return %1, %c0_i32, %c0_i32_0, %c0_i32_1 : i32, i32, i32, i32
  }
  func.func @transform_2(%arg0: i32, %arg1: i32) -> (i32, i32, i32) {
    %c0_i32 = arith.constant 0 : i32
    %c0_i32_0 = arith.constant 0 : i32
    %c0_i32_1 = arith.constant 0 : i32
    return %arg0, %c0_i32, %c0_i32_0 : i32, i32, i32
  }
  func.func @transform_3(%arg0: i32, %arg1: i32) -> (i32, i32) {
    %c0_i32 = arith.constant 0 : i32
    %c0_i32_0 = arith.constant 0 : i32
    %c0_i32_1 = arith.constant 0 : i32
    return %c0_i32, %c0_i32_0 : i32, i32
  }
  func.func @transform_4(%arg0: i32, %arg1: i32) -> (i32, i32) {
    %c0_i32 = arith.constant 0 : i32
    %c0_i32_0 = arith.constant 0 : i32
    %c0_i32_1 = arith.constant 0 : i32
    return %c0_i32, %c0_i32_0 : i32, i32
  }
  func.func @transform_5(%arg0: i32, %arg1: i32) -> (i32, i32) {
    %c0_i32 = arith.constant 0 : i32
    %c0_i32_0 = arith.constant 0 : i32
    %c0_i32_1 = arith.constant 0 : i32
    return %c0_i32, %c0_i32_0 : i32, i32
  }
  func.func @transform_6(%arg0: i32, %arg1: i32) -> (i32, i32) {
    %c0_i32 = arith.constant 0 : i32
    %c0_i32_0 = arith.constant 0 : i32
    %c0_i32_1 = arith.constant 0 : i32
    return %c0_i32, %c0_i32_0 : i32, i32
  }
  func.func @transform_7(%arg0: i32, %arg1: i32) -> (i32, i32) {
    %c0_i32 = arith.constant 0 : i32
    %c0_i32_0 = arith.constant 0 : i32
    %c0_i32_1 = arith.constant 0 : i32
    return %c0_i32, %c0_i32_0 : i32, i32
  }
  func.func @transform_8(%arg0: i32, %arg1: i32) -> (i32, i32, i32) {
    %c0_i32 = arith.constant 0 : i32
    %c0_i32_0 = arith.constant 0 : i32
    return %arg0, %c0_i32, %arg1 : i32, i32, i32
  }
}

</mosaic_0001>

<llo_original>
// kernel: tpu_custom_call.1
$region0: #{tpu_custom_call.1}
  #allocation0 [shape = 'u32[]', space=smem, size = 0x4, offset = 0x4, fixed_abs, tag = 'smem constant byte address 0x4 - core index']
  #allocation1 [shape = 'u32[144,128]{1,0:T(1,128)}', space=vmem, size = 0x12000, scoped, tag = 'internal scratch']
  %s0 = inlined_call_operand.vmem [shape: bf16[2,20,20,4], index: 0, kind: input, shape index: {}]
  %s1 = inlined_call_operand.vmem [shape: bf16[4,4,20,4], index: 1, kind: input, shape index: {}]
  %s2 = inlined_call_operand.vmem [shape: f32[2,1,8], index: 2, kind: input, shape index: {}]
  %s3 = inlined_call_operand.vmem [shape: f32[9,4], index: 3, kind: input, shape index: {}]
  %s4 = inlined_call_operand.vmem [shape: bf16[4,8], index: 4, kind: input, shape index: {}]
  %s5 = inlined_call_operand.vmem [shape: bf16[4,8], index: 5, kind: input, shape index: {}]
  %s6 = inlined_call_operand.vmem [shape: bf16[16,8], index: 6, kind: input, shape index: {}]
  %s7 = inlined_call_operand.vmem [shape: f32[2,8], index: 7, kind: input, shape index: {}]
  %s8 = inlined_call_operand.hbm [shape: f32[2,8,256], index: 8, kind: output, shape index: {}]
  %s9 = sld [smem:[#allocation0]]
  $region65: #{tpu_custom_call.1} parent=0
    _
  %s11 = ssub.s32 1, %s9
  %s12 = scalar_select 0, %s11, %s9
  $region1: #{tpu_custom_call.1} parent=0
    #allocation2 [shape = 'u8[8192]{0}', space=vmem, size = 0x2000, scoped, tag = 'output window, operand 0']
    #allocation3 [shape = 's32[2]{0}', space=sflag, size = 0x8, scoped, tag = 'scoped memory for tpu_custom_call.1']
    %13 = vsyncpa [#allocation3], 0
    %s14 = scalar_lea.sflag [#allocation3], 1
    %15 = vsyncpa %s14, 0
    loop: start=0, step=1, limit=6
    $region2: #{tpu_custom_call.1} parent=1 // loop_pre_header
      _
    $region3: #{tpu_custom_call.1} parent=1 // loop_header
      %s17 = sphi 0, %s21
      %p18 = scmp.ge.s32.totalorder %s17, 6
      %s24 = sphi 0, %s36
      %s25 = sphi 0, %s32
      %s26 = sphi 0, %s24
      %s27 = sphi 0, %s25
      %s28 = sphi 0, %s26
      %s29 = sphi 0, %s27
      %s41 = sphi 0, %s43
      %s44 = sphi 0, %s41
      %s45 = sphi 0, %s44
      %s61 = sphi 0, %s45
      %s71 = sphi 0, %s73
      %s74 = sphi 0, %s71
      %s75 = sphi 0, %s74
      %s91 = sphi 0, %s75
      %s97 = sphi 0, %s99
      %s100 = sphi 0, %s97
      %s101 = sphi 0, %s100
      %s117 = sphi 0, %s101
      %s121 = sphi 0, %s121
      %s123 = sphi 0, %s121
      %s124 = sphi 0, %s123
      %s138 = sphi 0, %s124
      %s142 = sphi 0, %s142
      %s144 = sphi 0, %s142
      %s145 = sphi 0, %s144
      %s159 = sphi 0, %s145
      %s163 = sphi 0, %s163
      %s165 = sphi 0, %s163
      %s166 = sphi 0, %s165
      %s180 = sphi 0, %s166
      %s184 = sphi 0, %s184
      %s186 = sphi 0, %s184
      %s187 = sphi 0, %s186
      %s201 = sphi 0, %s187
      %s205 = sphi 0, %s205
      %s207 = sphi 0, %s205
      %s208 = sphi 0, %s207
      %s222 = sphi 0, %s208
      %s230 = sphi 0, %s232
      %s233 = sphi 0, %s230
      %s234 = sphi 0, %s233
      %s250 = sphi 0, %s234
    $region4: #{tpu_custom_call.1} parent=1 // loop_header_branch
      %20 = sbr.rel (%p18) target = $region8
    $region5: #{tpu_custom_call.1} parent=1 // loop_body
      %s22 = ssub.s32 %s17, 1
      %s23 = ssub.s32 %s17, 2
      %s30 = sadd.s32 1, %s25
      %p31 = scmp.ge.s32.totalorder %s30, 2
      %s32 = scalar_select %p31, 0, %s30
      %s33 = sadd.s32 1, %s24
      %s34 = scalar_select %p31, %s33, %s24
      %p35 = scmp.ge.s32.totalorder %s34, 2
      %s36 = scalar_select %p35, 0, %s34
      %s37 = ssub.s32 %s24, %s36
      %s38 = ssub.s32 %s25, %s32
      %s39 = sor.u32 %s37, %s38
      %p40 = scmp.eq.s32.totalorder %s39, 0
      %s42 = sadd.s32 %s41, 1
      %s43 = scalar_select %p40, %s41, %s42
      %p46 = pneg %p40
      %p47 = scmp.eq.s32.totalorder %s17, 3
      %p48 = por %p46, %p47
      %p49 = scmp.ne.s32.totalorder %s41, %s44
      %p50 = scmp.eq.s32.totalorder %s17, 0
      %p51 = por %p49, %p50
      %p52 = scmp.ne.s32.totalorder %s41, %s44
      %p53 = scmp.eq.s32.totalorder %s22, 3
      %p54 = por %p52, %p53
      %p55 = scmp.ne.s32.totalorder %s44, %s45
      %p56 = scmp.eq.s32.totalorder %s22, 0
      %p57 = por %p55, %p56
      %p58 = scmp.ne.s32.totalorder %s44, %s45
      %p59 = scmp.eq.s32.totalorder %s23, 3
      %p60 = por %p58, %p59
      %p62 = scmp.ne.s32.totalorder %s45, %s61
      %p63 = scmp.eq.s32.totalorder %s23, 0
      %p64 = por %p62, %p63
      %s65 = smul.u32 %s24, 2
      %s66 = sadd.s32 %s65, %s25
      %s67 = smul.u32 %s36, 2
      %s68 = sadd.s32 %s67, %s32
      %s69 = ssub.s32 %s66, %s68
      %p70 = scmp.eq.s32.totalorder %s69, 0
      %s72 = sadd.s32 %s71, 1
      %s73 = scalar_select %p70, %s71, %s72
      %p76 = pneg %p70
      %p77 = scmp.eq.s32.totalorder %s17, 3
      %p78 = por %p76, %p77
      %p79 = scmp.ne.s32.totalorder %s71, %s74
      %p80 = scmp.eq.s32.totalorder %s17, 0
      %p81 = por %p79, %p80
      %p82 = scmp.ne.s32.totalorder %s71, %s74
      %p83 = scmp.eq.s32.totalorder %s22, 3
      %p84 = por %p82, %p83
      %p85 = scmp.ne.s32.totalorder %s74, %s75
      %p86 = scmp.eq.s32.totalorder %s22, 0
      %p87 = por %p85, %p86
      %p88 = scmp.ne.s32.totalorder %s74, %s75
      %p89 = scmp.eq.s32.totalorder %s23, 3
      %p90 = por %p88, %p89
      %p92 = scmp.ne.s32.totalorder %s75, %s91
      %p93 = scmp.eq.s32.totalorder %s23, 0
      %p94 = por %p92, %p93
      %s95 = ssub.s32 %s24, %s36
      %p96 = scmp.eq.s32.totalorder %s95, 0
      %s98 = sadd.s32 %s97, 1
      %s99 = scalar_select %p96, %s97, %s98
      %p102 = pneg %p96
      %p103 = scmp.eq.s32.totalorder %s17, 3
      %p104 = por %p102, %p103
      %p105 = scmp.ne.s32.totalorder %s97, %s100
      %p106 = scmp.eq.s32.totalorder %s17, 0
      %p107 = por %p105, %p106
      %p108 = scmp.ne.s32.totalorder %s97, %s100
      %p109 = scmp.eq.s32.totalorder %s22, 3
      %p110 = por %p108, %p109
      %p111 = scmp.ne.s32.totalorder %s100, %s101
      %p112 = scmp.eq.s32.totalorder %s22, 0
      %p113 = por %p111, %p112
      %p114 = scmp.ne.s32.totalorder %s100, %s101
      %p115 = scmp.eq.s32.totalorder %s23, 3
      %p116 = por %p114, %p115
      %p118 = scmp.ne.s32.totalorder %s101, %s117
      %p119 = scmp.eq.s32.totalorder %s23, 0
      %p120 = por %p118, %p119
      %s122 = sadd.s32 %s121, 1
      %p125 = scmp.eq.s32.totalorder %s17, 3
      %p126 = scmp.ne.s32.totalorder %s121, %s123
      %p127 = scmp.eq.s32.totalorder %s17, 0
      %p128 = por %p126, %p127
      %p129 = scmp.ne.s32.totalorder %s121, %s123
      %p130 = scmp.eq.s32.totalorder %s22, 3
      %p131 = por %p129, %p130
      %p132 = scmp.ne.s32.totalorder %s123, %s124
      %p133 = scmp.eq.s32.totalorder %s22, 0
      %p134 = por %p132, %p133
      %p135 = scmp.ne.s32.totalorder %s123, %s124
      %p136 = scmp.eq.s32.totalorder %s23, 3
      %p137 = por %p135, %p136
      %p139 = scmp.ne.s32.totalorder %s124, %s138
      %p140 = scmp.eq.s32.totalorder %s23, 0
      %p141 = por %p139, %p140
      %s143 = sadd.s32 %s142, 1
      %p146 = scmp.eq.s32.totalorder %s17, 3
      %p147 = scmp.ne.s32.totalorder %s142, %s144
      %p148 = scmp.eq.s32.totalorder %s17, 0
      %p149 = por %p147, %p148
      %p150 = scmp.ne.s32.totalorder %s142, %s144
      %p151 = scmp.eq.s32.totalorder %s22, 3
      %p152 = por %p150, %p151
      %p153 = scmp.ne.s32.totalorder %s144, %s145
      %p154 = scmp.eq.s32.totalorder %s22, 0
      %p155 = por %p153, %p154
      %p156 = scmp.ne.s32.totalorder %s144, %s145
      %p157 = scmp.eq.s32.totalorder %s23, 3
      %p158 = por %p156, %p157
      %p160 = scmp.ne.s32.totalorder %s145, %s159
      %p161 = scmp.eq.s32.totalorder %s23, 0
      %p162 = por %p160, %p161
      %s164 = sadd.s32 %s163, 1
      %p167 = scmp.eq.s32.totalorder %s17, 3
      %p168 = scmp.ne.s32.totalorder %s163, %s165
      %p169 = scmp.eq.s32.totalorder %s17, 0
      %p170 = por %p168, %p169
      %p171 = scmp.ne.s32.totalorder %s163, %s165
      %p172 = scmp.eq.s32.totalorder %s22, 3
      %p173 = por %p171, %p172
      %p174 = scmp.ne.s32.totalorder %s165, %s166
      %p175 = scmp.eq.s32.totalorder %s22, 0
      %p176 = por %p174, %p175
      %p177 = scmp.ne.s32.totalorder %s165, %s166
      %p178 = scmp.eq.s32.totalorder %s23, 3
      %p179 = por %p177, %p178
      %p181 = scmp.ne.s32.totalorder %s166, %s180
      %p182 = scmp.eq.s32.totalorder %s23, 0
      %p183 = por %p181, %p182
      %s185 = sadd.s32 %s184, 1
      %p188 = scmp.eq.s32.totalorder %s17, 3
      %p189 = scmp.ne.s32.totalorder %s184, %s186
      %p190 = scmp.eq.s32.totalorder %s17, 0
      %p191 = por %p189, %p190
      %p192 = scmp.ne.s32.totalorder %s184, %s186
      %p193 = scmp.eq.s32.totalorder %s22, 3
      %p194 = por %p192, %p193
      %p195 = scmp.ne.s32.totalorder %s186, %s187
      %p196 = scmp.eq.s32.totalorder %s22, 0
      %p197 = por %p195, %p196
      %p198 = scmp.ne.s32.totalorder %s186, %s187
      %p199 = scmp.eq.s32.totalorder %s23, 3
      %p200 = por %p198, %p199
      %p202 = scmp.ne.s32.totalorder %s187, %s201
      %p203 = scmp.eq.s32.totalorder %s23, 0
      %p204 = por %p202, %p203
      %s206 = sadd.s32 %s205, 1
      %p209 = scmp.eq.s32.totalorder %s17, 3
      %p210 = scmp.ne.s32.totalorder %s205, %s207
      %p211 = scmp.eq.s32.totalorder %s17, 0
      %p212 = por %p210, %p211
      %p213 = scmp.ne.s32.totalorder %s205, %s207
      %p214 = scmp.eq.s32.totalorder %s22, 3
      %p215 = por %p213, %p214
      %p216 = scmp.ne.s32.totalorder %s207, %s208
      %p217 = scmp.eq.s32.totalorder %s22, 0
      %p218 = por %p216, %p217
      %p219 = scmp.ne.s32.totalorder %s207, %s208
      %p220 = scmp.eq.s32.totalorder %s23, 3
      %p221 = por %p219, %p220
      %p223 = scmp.ne.s32.totalorder %s208, %s222
      %p224 = scmp.eq.s32.totalorder %s23, 0
      %p225 = por %p223, %p224
      %s226 = ssub.s32 %s24, %s36
      %s227 = ssub.s32 %s25, %s32
      %s228 = sor.u32 %s226, %s227
      %p229 = scmp.eq.s32.totalorder %s228, 0
      %s231 = sadd.s32 %s230, 1
      %s232 = scalar_select %p229, %s230, %s231
      %p235 = pneg %p229
      %p236 = scmp.eq.s32.totalorder %s17, 3
      %p237 = por %p235, %p236
      %p238 = scmp.ne.s32.totalorder %s230, %s233
      %p239 = scmp.eq.s32.totalorder %s17, 0
      %p240 = por %p238, %p239
      %p241 = scmp.ne.s32.totalorder %s230, %s233
      %p242 = scmp.eq.s32.totalorder %s22, 3
      %p243 = por %p241, %p242
      %p244 = scmp.ne.s32.totalorder %s233, %s234
      %p245 = scmp.eq.s32.totalorder %s22, 0
      %p246 = por %p244, %p245
      %p247 = scmp.ne.s32.totalorder %s233, %s234
      %p248 = scmp.eq.s32.totalorder %s23, 3
      %p249 = por %p247, %p248
      %p251 = scmp.ne.s32.totalorder %s234, %s250
      %p252 = scmp.eq.s32.totalorder %s23, 0
      %p253 = por %p251, %p252
      %p254 = scmp.le.s32.totalorder 1, %s17
      %p255 = scmp.lt.s32.totalorder %s17, 5
      %p256 = pnand %p254, %p255
      %p257 = pneg %p256
      // Predicated region
      $region9: #{tpu_custom_call.1} parent=5 // pred_check
        _
      $region10: #{tpu_custom_call.1} parent=5 // pred_check_branch
        %259 = sbr.rel (%p256) target = $region12
      $region11: #{tpu_custom_call.1} parent=5 // pred_region
        %s260 = ssub.s32 %s17, 1
        // Predicated region
        $region13: #{tpu_custom_call.1} parent=11 // pred_check
          %p261 = pneg %p134
        $region14: #{tpu_custom_call.1} parent=11 // pred_check_branch
          %263 = sbr.rel (%p261) target = $region16
        $region15: #{tpu_custom_call.1} parent=11 // pred_region
          _
        $region16: #{tpu_custom_call.1} parent=11 // pred_fallthru
          _
        // Predicated region
        $region17: #{tpu_custom_call.1} parent=11 // pred_check
          %p264 = pneg %p155
        $region18: #{tpu_custom_call.1} parent=11 // pred_check_branch
          %266 = sbr.rel (%p264) target = $region20
        $region19: #{tpu_custom_call.1} parent=11 // pred_region
          _
        $region20: #{tpu_custom_call.1} parent=11 // pred_fallthru
          _
        // Predicated region
        $region21: #{tpu_custom_call.1} parent=11 // pred_check
          %p267 = pneg %p176
        $region22: #{tpu_custom_call.1} parent=11 // pred_check_branch
          %269 = sbr.rel (%p267) target = $region24
        $region23: #{tpu_custom_call.1} parent=11 // pred_region
          _
        $region24: #{tpu_custom_call.1} parent=11 // pred_fallthru
          _
        // Predicated region
        $region25: #{tpu_custom_call.1} parent=11 // pred_check
          %p270 = pneg %p197
        $region26: #{tpu_custom_call.1} parent=11 // pred_check_branch
          %272 = sbr.rel (%p270) target = $region28
        $region27: #{tpu_custom_call.1} parent=11 // pred_region
          _
        $region28: #{tpu_custom_call.1} parent=11 // pred_fallthru
          _
        // Predicated region
        $region29: #{tpu_custom_call.1} parent=11 // pred_check
          %p273 = pneg %p218
        $region30: #{tpu_custom_call.1} parent=11 // pred_check_branch
          %275 = sbr.rel (%p273) target = $region32
        $region31: #{tpu_custom_call.1} parent=11 // pred_region
          _
        $region32: #{tpu_custom_call.1} parent=11 // pred_fallthru
          _
      $region12: #{tpu_custom_call.1} parent=5 // pred_fallthru
        _
      %p276 = scmp.lt.s32.totalorder %s17, 4
      // Predicated region
      $region33: #{tpu_custom_call.1} parent=5 // pred_check
        %p277 = pneg %p276
      $region34: #{tpu_custom_call.1} parent=5 // pred_check_branch
        %279 = sbr.rel (%p277) target = $region36
      $region35: #{tpu_custom_call.1} parent=5 // pred_region
        // Predicated region
        $region37: #{tpu_custom_call.1} parent=35 // pred_check
          %p280 = pneg %p51
        $region38: #{tpu_custom_call.1} parent=35 // pred_check_branch
          %282 = sbr.rel (%p280) target = $region40
        $region39: #{tpu_custom_call.1} parent=35 // pred_region
          %s283 = smul.u32 8, %s25
          %s284 = ssub.s32 20, %s283
          %p285 = scmp.lt.s32.totalorder %s284, 8
          %s286 = scalar_select %p285, %s284, 8
          %s287 = smul.u32 64, %s286
          %s288 = smul.u32 %s287, 3
          %p289 = scmp.lt.s32.totalorder %s24, 1
          %s290 = scalar_select %p289, %s24, 1
          %p291 = scmp.lt.s32.totalorder %s283, 19
          %s292 = scalar_select %p291, %s283, 19
          %s293 = smul.addr %s292, 3
          %s294 = smul.addr %s290, 60
          %s295 = sadd.s32 %s293, %s294
          %s296 = smul.addr %s295, 4
          %s297 = scalar_lea.vmem %s0, %s296
          %s298 = smul.u32 8, %s25
          %s299 = ssub.s32 20, %s298
          %p300 = scmp.lt.s32.totalorder %s299, 8
          %s301 = scalar_select %p300, %s299, 8
          %s302 = smul.u32 64, %s301
          %s303 = smul.u32 %s302, 3
        $region40: #{tpu_custom_call.1} parent=35 // pred_fallthru
          _
        // Predicated region
        $region41: #{tpu_custom_call.1} parent=35 // pred_check
          %p304 = pneg %p81
        $region42: #{tpu_custom_call.1} parent=35 // pred_check_branch
          %306 = sbr.rel (%p304) target = $region44
        $region43: #{tpu_custom_call.1} parent=35 // pred_region
          %s307 = smul.u32 %s24, 2
          %s308 = sadd.s32 %s307, %s25
          %p309 = scmp.lt.s32.totalorder %s308, 3
          %s310 = scalar_select %p309, %s308, 3
          %s311 = smul.addr %s310, 12
          %s312 = smul.addr %s311, 4
          %s313 = scalar_lea.vmem %s1, %s312
          %s314 = smul.u32 %s24, 2
          %s315 = sadd.s32 %s314, %s25
        $region44: #{tpu_custom_call.1} parent=35 // pred_fallthru
          _
        // Predicated region
        $region45: #{tpu_custom_call.1} parent=35 // pred_check
          %p316 = pneg %p107
        $region46: #{tpu_custom_call.1} parent=35 // pred_check_branch
          %318 = sbr.rel (%p316) target = $region48
        $region47: #{tpu_custom_call.1} parent=35 // pred_region
          %p319 = scmp.lt.s32.totalorder %s24, 1
          %s320 = scalar_select %p319, %s24, 1
          %s321 = scalar_lea.vmem %s2, %s320
        $region48: #{tpu_custom_call.1} parent=35 // pred_fallthru
          _
      $region36: #{tpu_custom_call.1} parent=5 // pred_fallthru
        _
      %p322 = scmp.le.s32.totalorder 1, %s17
      %p323 = scmp.lt.s32.totalorder %s17, 5
      %p324 = pnand %p322, %p323
      %p325 = pneg %p324
      // Predicated region
      $region49: #{tpu_custom_call.1} parent=5 // pred_check
        _
      $region50: #{tpu_custom_call.1} parent=5 // pred_check_branch
        %327 = sbr.rel (%p324) target = $region52
      $region51: #{tpu_custom_call.1} parent=5 // pred_region
        %s328 = ssub.s32 %s17, 1
        %s329 = smul.u32 8, %s27
        %s330 = ssub.s32 20, %s329
        %p331 = scmp.lt.s32.totalorder %s330, 8
        %s332 = scalar_select %p331, %s330, 8
        %s333 = smul.u32 64, %s332
        %s334 = smul.u32 %s333, 3
        %p335 = scmp.lt.s32.totalorder %s26, 1
        %s336 = scalar_select %p335, %s26, 1
        %p337 = scmp.lt.s32.totalorder %s329, 19
        %s338 = scalar_select %p337, %s329, 19
        %s339 = smul.addr %s338, 3
        %s340 = smul.addr %s336, 60
        %s341 = sadd.s32 %s339, %s340
        %s342 = smul.addr %s341, 4
        %s343 = scalar_lea.vmem %s0, %s342
        %p344 = pneg %p57
        %p345 = pneg %p54
        %s346 = smul.u32 %s26, 2
        %s347 = sadd.s32 %s346, %s27
        %p348 = scmp.lt.s32.totalorder %s347, 3
        %s349 = scalar_select %p348, %s347, 3
        %s350 = smul.addr %s349, 12
        %s351 = smul.addr %s350, 4
        %s352 = scalar_lea.vmem %s1, %s351
        %p353 = pneg %p87
        %p354 = pneg %p84
        %p355 = scmp.lt.s32.totalorder %s26, 1
        %s356 = scalar_select %p355, %s26, 1
        %s357 = scalar_lea.vmem %s2, %s356
        %p358 = pneg %p113
        %p359 = pneg %p110
        %p360 = pneg %p134
        %p361 = pneg %p131
        %p362 = pneg %p155
        %p363 = pneg %p152
        %p364 = pneg %p176
        %p365 = pneg %p173
        %p366 = pneg %p197
        %p367 = pneg %p194
        %p368 = pneg %p218
        %p369 = pneg %p215
        %p370 = pneg %p246
        %p371 = pneg %p243
        %s372 = sand.u32 %s233, 1
        %s373 = scalar_lea.sflag [#allocation3], %s372
        %s374 = sand.u32 %s233, 1
        %s375 = smul.addr %s374, 8
        %s376 = scalar_lea.vmem [#allocation2], %s375
        %s377 = smul.u32 8, %s27
        %s378 = ssub.s32 20, %s377
        %p379 = scmp.lt.s32.totalorder %s378, 8
        %s380 = scalar_select %p379, %s378, 8
        %s381 = smul.u32 64, %s380
        %s382 = smul.u32 %s381, 3
        %p383 = scmp.lt.s32.totalorder %s26, 1
        %s384 = scalar_select %p383, %s26, 1
        %p385 = scmp.lt.s32.totalorder %s377, 19
        %s386 = scalar_select %p385, %s377, 19
        %s387 = smul.addr %s386, 3
        %s388 = smul.addr %s384, 60
        %s389 = sadd.s32 %s387, %s388
        %s390 = smul.addr %s389, 4
        %s391 = scalar_lea.vmem %s0, %s390
        %s392 = smul.u32 8, %s27
        %s393 = ssub.s32 20, %s392
        %p394 = scmp.lt.s32.totalorder %s393, 8
        %s395 = scalar_select %p394, %s393, 8
        %s396 = smul.u32 64, %s395
        %s397 = smul.u32 %s396, 3
        %s398 = smul.u32 %s26, 2
        %s399 = sadd.s32 %s398, %s27
        %p400 = scmp.lt.s32.totalorder %s399, 3
        %s401 = scalar_select %p400, %s399, 3
        %s402 = smul.addr %s401, 12
        %s403 = smul.addr %s402, 4
        %s404 = scalar_lea.vmem %s1, %s403
        %s405 = smul.u32 %s26, 2
        %s406 = sadd.s32 %s405, %s27
        %p407 = scmp.lt.s32.totalorder %s26, 1
        %s408 = scalar_select %p407, %s26, 1
        %s409 = scalar_lea.vmem %s2, %s408
        %v410 = vld [vmem:[%s391] sm:$0xf]
        %v411 = vld [vmem:[%s391 + $0x4] sm:$0xf]
        %v412 = vld [vmem:[%s391 + $0x8] sm:$0x3]
        %v413 = vld [vmem:[%s391 + $0xc] sm:$0xf]
        %v414 = vld [vmem:[%s391 + $0x10] sm:$0xf]
        %v415 = vld [vmem:[%s391 + $0x14] sm:$0x3]
        %v416 = vld [vmem:[%s391 + $0x18] sm:$0xf]
        %v417 = vld [vmem:[%s391 + $0x1c] sm:$0xf]
        %v418 = vld [vmem:[%s391 + $0x20] sm:$0x3]
        %v419 = vld [vmem:[%s391 + $0x24] sm:$0xf]
        %v420 = vld [vmem:[%s391 + $0x28] sm:$0xf]
        %v421 = vld [vmem:[%s391 + $0x2c] sm:$0x3]
        %v422 = vld [vmem:[%s391 + $0x30] sm:$0xf]
        %v423 = vld [vmem:[%s391 + $0x34] sm:$0xf]
        %v424 = vld [vmem:[%s391 + $0x38] sm:$0x3]
        %v425 = vld [vmem:[%s391 + $0x3c] sm:$0xf]
        %v426 = vld [vmem:[%s391 + $0x40] sm:$0xf]
        %v427 = vld [vmem:[%s391 + $0x44] sm:$0x3]
        %v428 = vld [vmem:[%s391 + $0x48] sm:$0xf]
        %v429 = vld [vmem:[%s391 + $0x4c] sm:$0xf]
        %v430 = vld [vmem:[%s391 + $0x50] sm:$0x3]
        %v431 = vld [vmem:[%s391 + $0x54] sm:$0xf]
        %v432 = vld [vmem:[%s391 + $0x58] sm:$0xf]
        %v433 = vld [vmem:[%s391 + $0x5c] sm:$0x3]
        %v434 = vld [vmem:[%s404] sm:$0xf]
        %v435 = vld [vmem:[%s404 + $0x4] sm:$0xf]
        %v436 = vld [vmem:[%s404 + $0x8] sm:$0x3]
        %v437 = vld [vmem:[%s404 + $0xc] sm:$0xf]
        %v438 = vld [vmem:[%s404 + $0x10] sm:$0xf]
        %v439 = vld [vmem:[%s404 + $0x14] sm:$0x3]
        %v440 = vld [vmem:[%s404 + $0x18] sm:$0xf]
        %v441 = vld [vmem:[%s404 + $0x1c] sm:$0xf]
        %v442 = vld [vmem:[%s404 + $0x20] sm:$0x3]
        %v443 = vld [vmem:[%s404 + $0x24] sm:$0xf]
        %v444 = vld [vmem:[%s404 + $0x28] sm:$0xf]
        %v445 = vld [vmem:[%s404 + $0x2c] sm:$0x3]
        %v446 = vunpack.c.l.bf16 %v410
        %v447 = vunpack.c.l.bf16 %v411
        %v448 = vunpack.c.l.bf16 %v412
        %v449 = vunpack.c.l.bf16 %v413
        %v450 = vunpack.c.l.bf16 %v414
        %v451 = vunpack.c.l.bf16 %v415
        %v452 = vunpack.c.l.bf16 %v416
        %v453 = vunpack.c.l.bf16 %v417
        %v454 = vunpack.c.l.bf16 %v418
        %v455 = vunpack.c.l.bf16 %v419
        %v456 = vunpack.c.l.bf16 %v420
        %v457 = vunpack.c.l.bf16 %v421
        %v458 = vunpack.c.l.bf16 %v422
        %v459 = vunpack.c.l.bf16 %v423
        %v460 = vunpack.c.l.bf16 %v424
        %v461 = vunpack.c.l.bf16 %v425
        %v462 = vunpack.c.l.bf16 %v426
        %v463 = vunpack.c.l.bf16 %v427
        %v464 = vunpack.c.l.bf16 %v428
        %v465 = vunpack.c.l.bf16 %v429
        %v466 = vunpack.c.l.bf16 %v430
        %v467 = vunpack.c.l.bf16 %v431
        %v468 = vunpack.c.l.bf16 %v432
        %v469 = vunpack.c.l.bf16 %v433
        %v470 = vunpack.c.l.bf16 %v434
        %v471 = vunpack.c.l.bf16 %v435
        %v472 = vunpack.c.l.bf16 %v436
        %v473 = vunpack.c.l.bf16 %v437
        %v474 = vunpack.c.l.bf16 %v438
        %v475 = vunpack.c.l.bf16 %v439
        %v476 = vunpack.c.l.bf16 %v440
        %v477 = vunpack.c.l.bf16 %v441
        %v478 = vunpack.c.l.bf16 %v442
        %v479 = vunpack.c.l.bf16 %v443
        %v480 = vunpack.c.l.bf16 %v444
        %v481 = vunpack.c.l.bf16 %v445
        %v482 = vmax.f32 %v446, 0.0
        %v483 = vmax.f32 %v447, 0.0
        %v484 = vmax.f32 %v448, 0.0
        %v485 = vmax.f32 %v449, 0.0
        %v486 = vmax.f32 %v450, 0.0
        %v487 = vmax.f32 %v451, 0.0
        %v488 = vmax.f32 %v452, 0.0
        %v489 = vmax.f32 %v453, 0.0
        %v490 = vmax.f32 %v454, 0.0
        %v491 = vmax.f32 %v455, 0.0
        %v492 = vmax.f32 %v456, 0.0
        %v493 = vmax.f32 %v457, 0.0
        %v494 = vmax.f32 %v458, 0.0
        %v495 = vmax.f32 %v459, 0.0
        %v496 = vmax.f32 %v460, 0.0
        %v497 = vmax.f32 %v461, 0.0
        %v498 = vmax.f32 %v462, 0.0
        %v499 = vmax.f32 %v463, 0.0
        %v500 = vmax.f32 %v464, 0.0
        %v501 = vmax.f32 %v465, 0.0
        %v502 = vmax.f32 %v466, 0.0
        %v503 = vmax.f32 %v467, 0.0
        %v504 = vmax.f32 %v468, 0.0
        %v505 = vmax.f32 %v469, 0.0
        %v506 = vmax.f32 %v470, 0.0
        %v507 = vmax.f32 %v471, 0.0
        %v508 = vmax.f32 %v472, 0.0
        %v509 = vmax.f32 %v473, 0.0
        %v510 = vmax.f32 %v474, 0.0
        %v511 = vmax.f32 %v475, 0.0
        %v512 = vmax.f32 %v476, 0.0
        %v513 = vmax.f32 %v477, 0.0
        %v514 = vmax.f32 %v478, 0.0
        %v515 = vmax.f32 %v479, 0.0
        %v516 = vmax.f32 %v480, 0.0
        %v517 = vmax.f32 %v481, 0.0
        %v518 = vld [vmem:[%s3] sm:$0x1]
        %v519 = vlaneseq
        %v520 = vshrl.u32 %v519, 7
        %v521 = vsub.s32 0, %v520
        %v522 = vrot.slane %v518, %v521
        %v523 = vmul.f32 %v482, %v522
        %v524 = vmul.f32 %v483, %v522
        %v525 = vmul.f32 %v485, %v522
        %v526 = vmul.f32 %v486, %v522
        %v527 = vmul.f32 %v488, %v522
        %v528 = vmul.f32 %v489, %v522
        %v529 = vmul.f32 %v491, %v522
        %v530 = vmul.f32 %v492, %v522
        %v531 = vmul.f32 %v494, %v522
        %v532 = vmul.f32 %v495, %v522
        %v533 = vmul.f32 %v497, %v522
        %v534 = vmul.f32 %v498, %v522
        %v535 = vmul.f32 %v500, %v522
        %v536 = vmul.f32 %v501, %v522
        %v537 = vmul.f32 %v503, %v522
        %v538 = vmul.f32 %v504, %v522
        %v539 = vadd.f32 %v523, 0.0
        %v540 = vadd.f32 %v524, 0.0
        %v541 = vadd.f32 %v525, 0.0
        %v542 = vadd.f32 %v526, 0.0
        %v543 = vadd.f32 %v527, 0.0
        %v544 = vadd.f32 %v528, 0.0
        %v545 = vadd.f32 %v529, 0.0
        %v546 = vadd.f32 %v530, 0.0
        %v547 = vadd.f32 %v531, 0.0
        %v548 = vadd.f32 %v532, 0.0
        %v549 = vadd.f32 %v533, 0.0
        %v550 = vadd.f32 %v534, 0.0
        %v551 = vadd.f32 %v535, 0.0
        %v552 = vadd.f32 %v536, 0.0
        %v553 = vadd.f32 %v537, 0.0
        %v554 = vadd.f32 %v538, 0.0
        %v555 = vld [vmem:[%s3 + $0x1] sm:$0x1]
        %v556 = vlaneseq
        %v557 = vshrl.u32 %v556, 7
        %v558 = vsub.s32 0, %v557
        %v559 = vrot.slane %v555, %v558
        %v560 = vmul.f32 %v482, %v559
        %v561 = vmul.f32 %v483, %v559
        %v562 = vmul.f32 %v484, %v559
        %v563 = vmul.f32 %v485, %v559
        %v564 = vmul.f32 %v486, %v559
        %v565 = vmul.f32 %v487, %v559
        %v566 = vmul.f32 %v488, %v559
        %v567 = vmul.f32 %v489, %v559
        %v568 = vmul.f32 %v490, %v559
        %v569 = vmul.f32 %v491, %v559
        %v570 = vmul.f32 %v492, %v559
        %v571 = vmul.f32 %v493, %v559
        %v572 = vmul.f32 %v494, %v559
        %v573 = vmul.f32 %v495, %v559
        %v574 = vmul.f32 %v496, %v559
        %v575 = vmul.f32 %v497, %v559
        %v576 = vmul.f32 %v498, %v559
        %v577 = vmul.f32 %v499, %v559
        %v578 = vmul.f32 %v500, %v559
        %v579 = vmul.f32 %v501, %v559
        %v580 = vmul.f32 %v502, %v559
        %v581 = vmul.f32 %v503, %v559
        %v582 = vmul.f32 %v504, %v559
        %v583 = vmul.f32 %v505, %v559
        %vm608 = vcmask 1045504
        %v609 = vrot.slane %v560, 2
        %v610 = vrot.slane %v561, 2
        %v611 = vsel %vm608, %v609, %v610
        %v612 = vrot.slane %v562, 2
        %v613 = vsel %vm608, %v610, %v612
        %v614 = vrot.slane %v563, 2
        %v615 = vrot.slane %v564, 2
        %v616 = vsel %vm608, %v614, %v615
        %v617 = vrot.slane %v565, 2
        %v618 = vsel %vm608, %v615, %v617
        %v619 = vrot.slane %v566, 2
        %v620 = vrot.slane %v567, 2
        %v621 = vsel %vm608, %v619, %v620
        %v622 = vrot.slane %v568, 2
        %v623 = vsel %vm608, %v620, %v622
        %v624 = vrot.slane %v569, 2
        %v625 = vrot.slane %v570, 2
        %v626 = vsel %vm608, %v624, %v625
        %v627 = vrot.slane %v571, 2
        %v628 = vsel %vm608, %v625, %v627
        %v629 = vrot.slane %v572, 2
        %v630 = vrot.slane %v573, 2
        %v631 = vsel %vm608, %v629, %v630
        %v632 = vrot.slane %v574, 2
        %v633 = vsel %vm608, %v630, %v632
        %v634 = vrot.slane %v575, 2
        %v635 = vrot.slane %v576, 2
        %v636 = vsel %vm608, %v634, %v635
        %v637 = vrot.slane %v577, 2
        %v638 = vsel %vm608, %v635, %v637
        %v639 = vrot.slane %v578, 2
        %v640 = vrot.slane %v579, 2
        %v641 = vsel %vm608, %v639, %v640
        %v642 = vrot.slane %v580, 2
        %v643 = vsel %vm608, %v640, %v642
        %v644 = vrot.slane %v581, 2
        %v645 = vrot.slane %v582, 2
        %v646 = vsel %vm608, %v644, %v645
        %v647 = vrot.slane %v583, 2
        %v648 = vsel %vm608, %v645, %v647
        %v665 = vadd.f32 %v539, %v611
        %v666 = vadd.f32 %v540, %v613
        %v667 = vadd.f32 %v541, %v616
        %v668 = vadd.f32 %v542, %v618
        %v669 = vadd.f32 %v543, %v621
        %v670 = vadd.f32 %v544, %v623
        %v671 = vadd.f32 %v545, %v626
        %v672 = vadd.f32 %v546, %v628
        %v673 = vadd.f32 %v547, %v631
        %v674 = vadd.f32 %v548, %v633
        %v675 = vadd.f32 %v549, %v636
        %v676 = vadd.f32 %v550, %v638
        %v677 = vadd.f32 %v551, %v641
        %v678 = vadd.f32 %v552, %v643
        %v679 = vadd.f32 %v553, %v646
        %v680 = vadd.f32 %v554, %v648
        %v681 = vld [vmem:[%s3 + $0x2] sm:$0x1]
        %v682 = vlaneseq
        %v683 = vshrl.u32 %v682, 7
        %v684 = vsub.s32 0, %v683
        %v685 = vrot.slane %v681, %v684
        %v686 = vmul.f32 %v482, %v685
        %v687 = vmul.f32 %v483, %v685
        %v688 = vmul.f32 %v484, %v685
        %v689 = vmul.f32 %v485, %v685
        %v690 = vmul.f32 %v486, %v685
        %v691 = vmul.f32 %v487, %v685
        %v692 = vmul.f32 %v488, %v685
        %v693 = vmul.f32 %v489, %v685
        %v694 = vmul.f32 %v490, %v685
        %v695 = vmul.f32 %v491, %v685
        %v696 = vmul.f32 %v492, %v685
        %v697 = vmul.f32 %v493, %v685
        %v698 = vmul.f32 %v494, %v685
        %v699 = vmul.f32 %v495, %v685
        %v700 = vmul.f32 %v496, %v685
        %v701 = vmul.f32 %v497, %v685
        %v702 = vmul.f32 %v498, %v685
        %v703 = vmul.f32 %v499, %v685
        %v704 = vmul.f32 %v500, %v685
        %v705 = vmul.f32 %v501, %v685
        %v706 = vmul.f32 %v502, %v685
        %v707 = vmul.f32 %v503, %v685
        %v708 = vmul.f32 %v504, %v685
        %v709 = vmul.f32 %v505, %v685
        %vm734 = vcmask 1043456
        %v735 = vrot.slane %v686, 4
        %v736 = vrot.slane %v687, 4
        %v737 = vsel %vm734, %v735, %v736
        %v738 = vrot.slane %v688, 4
        %v739 = vsel %vm734, %v736, %v738
        %v740 = vrot.slane %v689, 4
        %v741 = vrot.slane %v690, 4
        %v742 = vsel %vm734, %v740, %v741
        %v743 = vrot.slane %v691, 4
        %v744 = vsel %vm734, %v741, %v743
        %v745 = vrot.slane %v692, 4
        %v746 = vrot.slane %v693, 4
        %v747 = vsel %vm734, %v745, %v746
        %v748 = vrot.slane %v694, 4
        %v749 = vsel %vm734, %v746, %v748
        %v750 = vrot.slane %v695, 4
        %v751 = vrot.slane %v696, 4
        %v752 = vsel %vm734, %v750, %v751
        %v753 = vrot.slane %v697, 4
        %v754 = vsel %vm734, %v751, %v753
        %v755 = vrot.slane %v698, 4
        %v756 = vrot.slane %v699, 4
        %v757 = vsel %vm734, %v755, %v756
        %v758 = vrot.slane %v700, 4
        %v759 = vsel %vm734, %v756, %v758
        %v760 = vrot.slane %v701, 4
        %v761 = vrot.slane %v702, 4
        %v762 = vsel %vm734, %v760, %v761
        %v763 = vrot.slane %v703, 4
        %v764 = vsel %vm734, %v761, %v763
        %v765 = vrot.slane %v704, 4
        %v766 = vrot.slane %v705, 4
        %v767 = vsel %vm734, %v765, %v766
        %v768 = vrot.slane %v706, 4
        %v769 = vsel %vm734, %v766, %v768
        %v770 = vrot.slane %v707, 4
        %v771 = vrot.slane %v708, 4
        %v772 = vsel %vm734, %v770, %v771
        %v773 = vrot.slane %v709, 4
        %v774 = vsel %vm734, %v771, %v773
        %v791 = vadd.f32 %v665, %v737
        %v792 = vadd.f32 %v666, %v739
        %v793 = vadd.f32 %v667, %v742
        %v794 = vadd.f32 %v668, %v744
        %v795 = vadd.f32 %v669, %v747
        %v796 = vadd.f32 %v670, %v749
        %v797 = vadd.f32 %v671, %v752
        %v798 = vadd.f32 %v672, %v754
        %v799 = vadd.f32 %v673, %v757
        %v800 = vadd.f32 %v674, %v759
        %v801 = vadd.f32 %v675, %v762
        %v802 = vadd.f32 %v676, %v764
        %v803 = vadd.f32 %v677, %v767
        %v804 = vadd.f32 %v678, %v769
        %v805 = vadd.f32 %v679, %v772
        %v806 = vadd.f32 %v680, %v774
        %v807 = vld [vmem:[%s3 + $0x3] sm:$0x1]
        %v808 = vlaneseq
        %v809 = vshrl.u32 %v808, 7
        %v810 = vsub.s32 0, %v809
        %v811 = vrot.slane %v807, %v810
        %v812 = vmul.f32 %v488, %v811
        %v813 = vmul.f32 %v489, %v811
        %v814 = vmul.f32 %v491, %v811
        %v815 = vmul.f32 %v492, %v811
        %v816 = vmul.f32 %v494, %v811
        %v817 = vmul.f32 %v495, %v811
        %v818 = vmul.f32 %v497, %v811
        %v819 = vmul.f32 %v498, %v811
        %v820 = vmul.f32 %v500, %v811
        %v821 = vmul.f32 %v501, %v811
        %v822 = vmul.f32 %v503, %v811
        %v823 = vmul.f32 %v504, %v811
        %v824 = vmul.f32 %v506, %v811
        %v825 = vmul.f32 %v507, %v811
        %v826 = vmul.f32 %v509, %v811
        %v827 = vmul.f32 %v510, %v811
        %v828 = vadd.f32 %v791, %v812
        %v829 = vadd.f32 %v792, %v813
        %v830 = vadd.f32 %v793, %v814
        %v831 = vadd.f32 %v794, %v815
        %v832 = vadd.f32 %v795, %v816
        %v833 = vadd.f32 %v796, %v817
        %v834 = vadd.f32 %v797, %v818
        %v835 = vadd.f32 %v798, %v819
        %v836 = vadd.f32 %v799, %v820
        %v837 = vadd.f32 %v800, %v821
        %v838 = vadd.f32 %v801, %v822
        %v839 = vadd.f32 %v802, %v823
        %v840 = vadd.f32 %v803, %v824
        %v841 = vadd.f32 %v804, %v825
        %v842 = vadd.f32 %v805, %v826
        %v843 = vadd.f32 %v806, %v827
        %v844 = vld [vmem:[%s3 + $0x4] sm:$0x1]
        %v845 = vlaneseq
        %v846 = vshrl.u32 %v845, 7
        %v847 = vsub.s32 0, %v846
        %v848 = vrot.slane %v844, %v847
        %v849 = vmul.f32 %v488, %v848
        %v850 = vmul.f32 %v489, %v848
        %v851 = vmul.f32 %v490, %v848
        %v852 = vmul.f32 %v491, %v848
        %v853 = vmul.f32 %v492, %v848
        %v854 = vmul.f32 %v493, %v848
        %v855 = vmul.f32 %v494, %v848
        %v856 = vmul.f32 %v495, %v848
        %v857 = vmul.f32 %v496, %v848
        %v858 = vmul.f32 %v497, %v848
        %v859 = vmul.f32 %v498, %v848
        %v860 = vmul.f32 %v499, %v848
        %v861 = vmul.f32 %v500, %v848
        %v862 = vmul.f32 %v501, %v848
        %v863 = vmul.f32 %v502, %v848
        %v864 = vmul.f32 %v503, %v848
        %v865 = vmul.f32 %v504, %v848
        %v866 = vmul.f32 %v505, %v848
        %v867 = vmul.f32 %v506, %v848
        %v868 = vmul.f32 %v507, %v848
        %v869 = vmul.f32 %v508, %v848
        %v870 = vmul.f32 %v509, %v848
        %v871 = vmul.f32 %v510, %v848
        %v872 = vmul.f32 %v511, %v848
        %v897 = vrot.slane %v849, 2
        %v898 = vrot.slane %v850, 2
        %v899 = vsel %vm608, %v897, %v898
        %v900 = vrot.slane %v851, 2
        %v901 = vsel %vm608, %v898, %v900
        %v902 = vrot.slane %v852, 2
        %v903 = vrot.slane %v853, 2
        %v904 = vsel %vm608, %v902, %v903
        %v905 = vrot.slane %v854, 2
        %v906 = vsel %vm608, %v903, %v905
        %v907 = vrot.slane %v855, 2
        %v908 = vrot.slane %v856, 2
        %v909 = vsel %vm608, %v907, %v908
        %v910 = vrot.slane %v857, 2
        %v911 = vsel %vm608, %v908, %v910
        %v912 = vrot.slane %v858, 2
        %v913 = vrot.slane %v859, 2
        %v914 = vsel %vm608, %v912, %v913
        %v915 = vrot.slane %v860, 2
        %v916 = vsel %vm608, %v913, %v915
        %v917 = vrot.slane %v861, 2
        %v918 = vrot.slane %v862, 2
        %v919 = vsel %vm608, %v917, %v918
        %v920 = vrot.slane %v863, 2
        %v921 = vsel %vm608, %v918, %v920
        %v922 = vrot.slane %v864, 2
        %v923 = vrot.slane %v865, 2
        %v924 = vsel %vm608, %v922, %v923
        %v925 = vrot.slane %v866, 2
        %v926 = vsel %vm608, %v923, %v925
        %v927 = vrot.slane %v867, 2
        %v928 = vrot.slane %v868, 2
        %v929 = vsel %vm608, %v927, %v928
        %v930 = vrot.slane %v869, 2
        %v931 = vsel %vm608, %v928, %v930
        %v932 = vrot.slane %v870, 2
        %v933 = vrot.slane %v871, 2
        %v934 = vsel %vm608, %v932, %v933
        %v935 = vrot.slane %v872, 2
        %v936 = vsel %vm608, %v933, %v935
        %v953 = vadd.f32 %v828, %v899
        %v954 = vadd.f32 %v829, %v901
        %v955 = vadd.f32 %v830, %v904
        %v956 = vadd.f32 %v831, %v906
        %v957 = vadd.f32 %v832, %v909
        %v958 = vadd.f32 %v833, %v911
        %v959 = vadd.f32 %v834, %v914
        %v960 = vadd.f32 %v835, %v916
        %v961 = vadd.f32 %v836, %v919
        %v962 = vadd.f32 %v837, %v921
        %v963 = vadd.f32 %v838, %v924
        %v964 = vadd.f32 %v839, %v926
        %v965 = vadd.f32 %v840, %v929
        %v966 = vadd.f32 %v841, %v931
        %v967 = vadd.f32 %v842, %v934
        %v968 = vadd.f32 %v843, %v936
        %v969 = vld [vmem:[%s3 + $0x5] sm:$0x1]
        %v970 = vlaneseq
        %v971 = vshrl.u32 %v970, 7
        %v972 = vsub.s32 0, %v971
        %v973 = vrot.slane %v969, %v972
        %v974 = vmul.f32 %v488, %v973
        %v975 = vmul.f32 %v489, %v973
        %v976 = vmul.f32 %v490, %v973
        %v977 = vmul.f32 %v491, %v973
        %v978 = vmul.f32 %v492, %v973
        %v979 = vmul.f32 %v493, %v973
        %v980 = vmul.f32 %v494, %v973
        %v981 = vmul.f32 %v495, %v973
        %v982 = vmul.f32 %v496, %v973
        %v983 = vmul.f32 %v497, %v973
        %v984 = vmul.f32 %v498, %v973
        %v985 = vmul.f32 %v499, %v973
        %v986 = vmul.f32 %v500, %v973
        %v987 = vmul.f32 %v501, %v973
        %v988 = vmul.f32 %v502, %v973
        %v989 = vmul.f32 %v503, %v973
        %v990 = vmul.f32 %v504, %v973
        %v991 = vmul.f32 %v505, %v973
        %v992 = vmul.f32 %v506, %v973
        %v993 = vmul.f32 %v507, %v973
        %v994 = vmul.f32 %v508, %v973
        %v995 = vmul.f32 %v509, %v973
        %v996 = vmul.f32 %v510, %v973
        %v997 = vmul.f32 %v511, %v973
        %v1022 = vrot.slane %v974, 4
        %v1023 = vrot.slane %v975, 4
        %v1024 = vsel %vm734, %v1022, %v1023
        %v1025 = vrot.slane %v976, 4
        %v1026 = vsel %vm734, %v1023, %v1025
        %v1027 = vrot.slane %v977, 4
        %v1028 = vrot.slane %v978, 4
        %v1029 = vsel %vm734, %v1027, %v1028
        %v1030 = vrot.slane %v979, 4
        %v1031 = vsel %vm734, %v1028, %v1030
        %v1032 = vrot.slane %v980, 4
        %v1033 = vrot.slane %v981, 4
        %v1034 = vsel %vm734, %v1032, %v1033
        %v1035 = vrot.slane %v982, 4
        %v1036 = vsel %vm734, %v1033, %v1035
        %v1037 = vrot.slane %v983, 4
        %v1038 = vrot.slane %v984, 4
        %v1039 = vsel %vm734, %v1037, %v1038
        %v1040 = vrot.slane %v985, 4
        %v1041 = vsel %vm734, %v1038, %v1040
        %v1042 = vrot.slane %v986, 4
        %v1043 = vrot.slane %v987, 4
        %v1044 = vsel %vm734, %v1042, %v1043
        %v1045 = vrot.slane %v988, 4
        %v1046 = vsel %vm734, %v1043, %v1045
        %v1047 = vrot.slane %v989, 4
        %v1048 = vrot.slane %v990, 4
        %v1049 = vsel %vm734, %v1047, %v1048
        %v1050 = vrot.slane %v991, 4
        %v1051 = vsel %vm734, %v1048, %v1050
        %v1052 = vrot.slane %v992, 4
        %v1053 = vrot.slane %v993, 4
        %v1054 = vsel %vm734, %v1052, %v1053
        %v1055 = vrot.slane %v994, 4
        %v1056 = vsel %vm734, %v1053, %v1055
        %v1057 = vrot.slane %v995, 4
        %v1058 = vrot.slane %v996, 4
        %v1059 = vsel %vm734, %v1057, %v1058
        %v1060 = vrot.slane %v997, 4
        %v1061 = vsel %vm734, %v1058, %v1060
        %v1078 = vadd.f32 %v953, %v1024
        %v1079 = vadd.f32 %v954, %v1026
        %v1080 = vadd.f32 %v955, %v1029
        %v1081 = vadd.f32 %v956, %v1031
        %v1082 = vadd.f32 %v957, %v1034
        %v1083 = vadd.f32 %v958, %v1036
        %v1084 = vadd.f32 %v959, %v1039
        %v1085 = vadd.f32 %v960, %v1041
        %v1086 = vadd.f32 %v961, %v1044
        %v1087 = vadd.f32 %v962, %v1046
        %v1088 = vadd.f32 %v963, %v1049
        %v1089 = vadd.f32 %v964, %v1051
        %v1090 = vadd.f32 %v965, %v1054
        %v1091 = vadd.f32 %v966, %v1056
        %v1092 = vadd.f32 %v967, %v1059
        %v1093 = vadd.f32 %v968, %v1061
        %v1094 = vld [vmem:[%s3 + $0x6] sm:$0x1]
        %v1095 = vlaneseq
        %v1096 = vshrl.u32 %v1095, 7
        %v1097 = vsub.s32 0, %v1096
        %v1098 = vrot.slane %v1094, %v1097
        %v1099 = vmul.f32 %v494, %v1098
        %v1100 = vmul.f32 %v495, %v1098
        %v1101 = vmul.f32 %v497, %v1098
        %v1102 = vmul.f32 %v498, %v1098
        %v1103 = vmul.f32 %v500, %v1098
        %v1104 = vmul.f32 %v501, %v1098
        %v1105 = vmul.f32 %v503, %v1098
        %v1106 = vmul.f32 %v504, %v1098
        %v1107 = vmul.f32 %v506, %v1098
        %v1108 = vmul.f32 %v507, %v1098
        %v1109 = vmul.f32 %v509, %v1098
        %v1110 = vmul.f32 %v510, %v1098
        %v1111 = vmul.f32 %v512, %v1098
        %v1112 = vmul.f32 %v513, %v1098
        %v1113 = vmul.f32 %v515, %v1098
        %v1114 = vmul.f32 %v516, %v1098
        %v1115 = vadd.f32 %v1078, %v1099
        %v1116 = vadd.f32 %v1079, %v1100
        %v1117 = vadd.f32 %v1080, %v1101
        %v1118 = vadd.f32 %v1081, %v1102
        %v1119 = vadd.f32 %v1082, %v1103
        %v1120 = vadd.f32 %v1083, %v1104
        %v1121 = vadd.f32 %v1084, %v1105
        %v1122 = vadd.f32 %v1085, %v1106
        %v1123 = vadd.f32 %v1086, %v1107
        %v1124 = vadd.f32 %v1087, %v1108
        %v1125 = vadd.f32 %v1088, %v1109
        %v1126 = vadd.f32 %v1089, %v1110
        %v1127 = vadd.f32 %v1090, %v1111
        %v1128 = vadd.f32 %v1091, %v1112
        %v1129 = vadd.f32 %v1092, %v1113
        %v1130 = vadd.f32 %v1093, %v1114
        %v1131 = vld [vmem:[%s3 + $0x7] sm:$0x1]
        %v1132 = vlaneseq
        %v1133 = vshrl.u32 %v1132, 7
        %v1134 = vsub.s32 0, %v1133
        %v1135 = vrot.slane %v1131, %v1134
        %v1136 = vmul.f32 %v494, %v1135
        %v1137 = vmul.f32 %v495, %v1135
        %v1138 = vmul.f32 %v496, %v1135
        %v1139 = vmul.f32 %v497, %v1135
        %v1140 = vmul.f32 %v498, %v1135
        %v1141 = vmul.f32 %v499, %v1135
        %v1142 = vmul.f32 %v500, %v1135
        %v1143 = vmul.f32 %v501, %v1135
        %v1144 = vmul.f32 %v502, %v1135
        %v1145 = vmul.f32 %v503, %v1135
        %v1146 = vmul.f32 %v504, %v1135
        %v1147 = vmul.f32 %v505, %v1135
        %v1148 = vmul.f32 %v506, %v1135
        %v1149 = vmul.f32 %v507, %v1135
        %v1150 = vmul.f32 %v508, %v1135
        %v1151 = vmul.f32 %v509, %v1135
        %v1152 = vmul.f32 %v510, %v1135
        %v1153 = vmul.f32 %v511, %v1135
        %v1154 = vmul.f32 %v512, %v1135
        %v1155 = vmul.f32 %v513, %v1135
        %v1156 = vmul.f32 %v514, %v1135
        %v1157 = vmul.f32 %v515, %v1135
        %v1158 = vmul.f32 %v516, %v1135
        %v1159 = vmul.f32 %v517, %v1135
        %v1184 = vrot.slane %v1136, 2
        %v1185 = vrot.slane %v1137, 2
        %v1186 = vsel %vm608, %v1184, %v1185
        %v1187 = vrot.slane %v1138, 2
        %v1188 = vsel %vm608, %v1185, %v1187
        %v1189 = vrot.slane %v1139, 2
        %v1190 = vrot.slane %v1140, 2
        %v1191 = vsel %vm608, %v1189, %v1190
        %v1192 = vrot.slane %v1141, 2
        %v1193 = vsel %vm608, %v1190, %v1192
        %v1194 = vrot.slane %v1142, 2
        %v1195 = vrot.slane %v1143, 2
        %v1196 = vsel %vm608, %v1194, %v1195
        %v1197 = vrot.slane %v1144, 2
        %v1198 = vsel %vm608, %v1195, %v1197
        %v1199 = vrot.slane %v1145, 2
        %v1200 = vrot.slane %v1146, 2
        %v1201 = vsel %vm608, %v1199, %v1200
        %v1202 = vrot.slane %v1147, 2
        %v1203 = vsel %vm608, %v1200, %v1202
        %v1204 = vrot.slane %v1148, 2
        %v1205 = vrot.slane %v1149, 2
        %v1206 = vsel %vm608, %v1204, %v1205
        %v1207 = vrot.slane %v1150, 2
        %v1208 = vsel %vm608, %v1205, %v1207
        %v1209 = vrot.slane %v1151, 2
        %v1210 = vrot.slane %v1152, 2
        %v1211 = vsel %vm608, %v1209, %v1210
        %v1212 = vrot.slane %v1153, 2
        %v1213 = vsel %vm608, %v1210, %v1212
        %v1214 = vrot.slane %v1154, 2
        %v1215 = vrot.slane %v1155, 2
        %v1216 = vsel %vm608, %v1214, %v1215
        %v1217 = vrot.slane %v1156, 2
        %v1218 = vsel %vm608, %v1215, %v1217
        %v1219 = vrot.slane %v1157, 2
        %v1220 = vrot.slane %v1158, 2
        %v1221 = vsel %vm608, %v1219, %v1220
        %v1222 = vrot.slane %v1159, 2
        %v1223 = vsel %vm608, %v1220, %v1222
        %v1240 = vadd.f32 %v1115, %v1186
        %v1241 = vadd.f32 %v1116, %v1188
        %v1242 = vadd.f32 %v1117, %v1191
        %v1243 = vadd.f32 %v1118, %v1193
        %v1244 = vadd.f32 %v1119, %v1196
        %v1245 = vadd.f32 %v1120, %v1198
        %v1246 = vadd.f32 %v1121, %v1201
        %v1247 = vadd.f32 %v1122, %v1203
        %v1248 = vadd.f32 %v1123, %v1206
        %v1249 = vadd.f32 %v1124, %v1208
        %v1250 = vadd.f32 %v1125, %v1211
        %v1251 = vadd.f32 %v1126, %v1213
        %v1252 = vadd.f32 %v1127, %v1216
        %v1253 = vadd.f32 %v1128, %v1218
        %v1254 = vadd.f32 %v1129, %v1221
        %v1255 = vadd.f32 %v1130, %v1223
        %v1256 = vld [vmem:[%s3 + $0x8] sm:$0x1]
        %v1257 = vlaneseq
        %v1258 = vshrl.u32 %v1257, 7
        %v1259 = vsub.s32 0, %v1258
        %v1260 = vrot.slane %v1256, %v1259
        %v1261 = vmul.f32 %v494, %v1260
        %v1262 = vmul.f32 %v495, %v1260
        %v1263 = vmul.f32 %v496, %v1260
        %v1264 = vmul.f32 %v497, %v1260
        %v1265 = vmul.f32 %v498, %v1260
        %v1266 = vmul.f32 %v499, %v1260
        %v1267 = vmul.f32 %v500, %v1260
        %v1268 = vmul.f32 %v501, %v1260
        %v1269 = vmul.f32 %v502, %v1260
        %v1270 = vmul.f32 %v503, %v1260
        %v1271 = vmul.f32 %v504, %v1260
        %v1272 = vmul.f32 %v505, %v1260
        %v1273 = vmul.f32 %v506, %v1260
        %v1274 = vmul.f32 %v507, %v1260
        %v1275 = vmul.f32 %v508, %v1260
        %v1276 = vmul.f32 %v509, %v1260
        %v1277 = vmul.f32 %v510, %v1260
        %v1278 = vmul.f32 %v511, %v1260
        %v1279 = vmul.f32 %v512, %v1260
        %v1280 = vmul.f32 %v513, %v1260
        %v1281 = vmul.f32 %v514, %v1260
        %v1282 = vmul.f32 %v515, %v1260
        %v1283 = vmul.f32 %v516, %v1260
        %v1284 = vmul.f32 %v517, %v1260
        %v1309 = vrot.slane %v1261, 4
        %v1310 = vrot.slane %v1262, 4
        %v1311 = vsel %vm734, %v1309, %v1310
        %v1312 = vrot.slane %v1263, 4
        %v1313 = vsel %vm734, %v1310, %v1312
        %v1314 = vrot.slane %v1264, 4
        %v1315 = vrot.slane %v1265, 4
        %v1316 = vsel %vm734, %v1314, %v1315
        %v1317 = vrot.slane %v1266, 4
        %v1318 = vsel %vm734, %v1315, %v1317
        %v1319 = vrot.slane %v1267, 4
        %v1320 = vrot.slane %v1268, 4
        %v1321 = vsel %vm734, %v1319, %v1320
        %v1322 = vrot.slane %v1269, 4
        %v1323 = vsel %vm734, %v1320, %v1322
        %v1324 = vrot.slane %v1270, 4
        %v1325 = vrot.slane %v1271, 4
        %v1326 = vsel %vm734, %v1324, %v1325
        %v1327 = vrot.slane %v1272, 4
        %v1328 = vsel %vm734, %v1325, %v1327
        %v1329 = vrot.slane %v1273, 4
        %v1330 = vrot.slane %v1274, 4
        %v1331 = vsel %vm734, %v1329, %v1330
        %v1332 = vrot.slane %v1275, 4
        %v1333 = vsel %vm734, %v1330, %v1332
        %v1334 = vrot.slane %v1276, 4
        %v1335 = vrot.slane %v1277, 4
        %v1336 = vsel %vm734, %v1334, %v1335
        %v1337 = vrot.slane %v1278, 4
        %v1338 = vsel %vm734, %v1335, %v1337
        %v1339 = vrot.slane %v1279, 4
        %v1340 = vrot.slane %v1280, 4
        %v1341 = vsel %vm734, %v1339, %v1340
        %v1342 = vrot.slane %v1281, 4
        %v1343 = vsel %vm734, %v1340, %v1342
        %v1344 = vrot.slane %v1282, 4
        %v1345 = vrot.slane %v1283, 4
        %v1346 = vsel %vm734, %v1344, %v1345
        %v1347 = vrot.slane %v1284, 4
        %v1348 = vsel %vm734, %v1345, %v1347
        %v1365 = vadd.f32 %v1240, %v1311
        %v1366 = vadd.f32 %v1241, %v1313
        %v1367 = vadd.f32 %v1242, %v1316
        %v1368 = vadd.f32 %v1243, %v1318
        %v1369 = vadd.f32 %v1244, %v1321
        %v1370 = vadd.f32 %v1245, %v1323
        %v1371 = vadd.f32 %v1246, %v1326
        %v1372 = vadd.f32 %v1247, %v1328
        %v1373 = vadd.f32 %v1248, %v1331
        %v1374 = vadd.f32 %v1249, %v1333
        %v1375 = vadd.f32 %v1250, %v1336
        %v1376 = vadd.f32 %v1251, %v1338
        %v1377 = vadd.f32 %v1252, %v1341
        %v1378 = vadd.f32 %v1253, %v1343
        %v1379 = vadd.f32 %v1254, %v1346
        %v1380 = vadd.f32 %v1255, %v1348
        %v1405 = vrot.slane %v488, 2
        %v1406 = vrot.slane %v489, 2
        %v1407 = vsel %vm608, %v1405, %v1406
        %v1408 = vrot.slane %v490, 2
        %v1409 = vsel %vm608, %v1406, %v1408
        %v1410 = vrot.slane %v491, 2
        %v1411 = vrot.slane %v492, 2
        %v1412 = vsel %vm608, %v1410, %v1411
        %v1413 = vrot.slane %v493, 2
        %v1414 = vsel %vm608, %v1411, %v1413
        %v1415 = vrot.slane %v494, 2
        %v1416 = vrot.slane %v495, 2
        %v1417 = vsel %vm608, %v1415, %v1416
        %v1418 = vrot.slane %v496, 2
        %v1419 = vsel %vm608, %v1416, %v1418
        %v1420 = vrot.slane %v497, 2
        %v1421 = vrot.slane %v498, 2
        %v1422 = vsel %vm608, %v1420, %v1421
        %v1423 = vrot.slane %v499, 2
        %v1424 = vsel %vm608, %v1421, %v1423
        %v1425 = vrot.slane %v500, 2
        %v1426 = vrot.slane %v501, 2
        %v1427 = vsel %vm608, %v1425, %v1426
        %v1428 = vrot.slane %v502, 2
        %v1429 = vsel %vm608, %v1426, %v1428
        %v1430 = vrot.slane %v503, 2
        %v1431 = vrot.slane %v504, 2
        %v1432 = vsel %vm608, %v1430, %v1431
        %v1433 = vrot.slane %v505, 2
        %v1434 = vsel %vm608, %v1431, %v1433
        %v1435 = vrot.slane %v506, 2
        %v1436 = vrot.slane %v507, 2
        %v1437 = vsel %vm608, %v1435, %v1436
        %v1438 = vrot.slane %v508, 2
        %v1439 = vsel %vm608, %v1436, %v1438
        %v1440 = vrot.slane %v509, 2
        %v1441 = vrot.slane %v510, 2
        %v1442 = vsel %vm608, %v1440, %v1441
        %v1443 = vrot.slane %v511, 2
        %v1444 = vsel %vm608, %v1441, %v1443
        %v1445 = vld [vmem:[%s7] sm:$0x1]
        %v1446 = vld [vmem:[%s7 + $0x1] sm:$0x1]
        %v1447 = vld [vmem:[%s4] sm:$0x3]
        %v1448 = vunpack.c.l.bf16 %v1447
        %v1449 = vlaneseq
        %v1450 = vshrl.u32 %v1449, 7
        %v1451 = vsub.s32 0, %v1450
        %v1452 = vrot.slane %v1445, %v1451
        %vm1453 = vcmask 31744
        %v1454 = vsel %vm1453, %v1407, 0
        %v1456 = vsel %vm1453, %v1409, 0
        %v1458 = vsel %vm1453, %v1412, 0
        %v1460 = vsel %vm1453, %v1414, 0
        %v1462 = vsel %vm1453, %v1417, 0
        %v1464 = vsel %vm1453, %v1419, 0
        %v1466 = vsel %vm1453, %v1422, 0
        %v1468 = vsel %vm1453, %v1424, 0
        %v1470 = vsel %vm1453, %v1427, 0
        %v1472 = vsel %vm1453, %v1429, 0
        %v1474 = vsel %vm1453, %v1432, 0
        %v1476 = vsel %vm1453, %v1434, 0
        %v1478 = vsel %vm1453, %v1437, 0
        %v1480 = vsel %vm1453, %v1439, 0
        %v1482 = vsel %vm1453, %v1442, 0
        %v1484 = vsel %vm1453, %v1444, 0
        %v1487 = vsel %vm734, %v1448, 0
        %1489 = vmatprep.subr.mxu0 0.0
        %1490 = vmatpush1.msra.mxu0 0.0
        %1491 = vmatprep.subr.mxu0 0.0
        %1492 = vmatpush1.msra.mxu0 0.0
        %1493 = vmatprep.subr.mxu0 0.0
        %1494 = vmatpush1.msra.mxu0 0.0
        %1495 = vmatprep.subr.mxu0 0.0
        %1496 = vmatpush1.msra.mxu0 0.0
        %1497 = vmatprep.subr.mxu0 0.0
        %1498 = vmatpush1.msra.mxu0 0.0
        %1499 = vmatprep.subr.mxu0 0.0
        %1500 = vmatpush1.msra.mxu0 0.0
        %1501 = vmatprep.subr.mxu0 0.0
        %1502 = vmatpush1.msra.mxu0 0.0
        %1503 = vmatprep.subr.mxu0 0.0
        %1504 = vmatpush1.msra.mxu0 0.0
        %1505 = vmatprep.subr.mxu0 0.0
        %1506 = vmatpush1.msra.mxu0 0.0
        %1507 = vmatprep.subr.mxu0 0.0
        %1508 = vmatpush1.msra.mxu0 0.0
        %1509 = vmatprep.subr.mxu0 0.0
        %1510 = vmatpush1.msra.mxu0 0.0
        %1511 = vmatprep.subr.mxu0 0.0
        %1512 = vmatpush1.msra.mxu0 0.0
        %1513 = vmatprep.subr.mxu0 0.0
        %1514 = vmatpush1.msra.mxu0 0.0
        %1515 = vmatprep.subr.mxu0 0.0
        %1516 = vmatpush1.msra.mxu0 0.0
        %1517 = vmatprep.subr.mxu0 0.0
        %1518 = vmatpush1.msra.mxu0 0.0
        %1519 = vmatprep.subr.mxu0 0.0
        %1520 = vmatpush1.msra.mxu0 %v1487
        %1521 = vmatprep.subr.mxu0 0.0
        %1522 = vmatpush2.msra.mxu0 0.0
        %1523 = vmatprep.subr.mxu0 0.0
        %1524 = vmatpush2.msra.mxu0 0.0
        %1525 = vmatprep.subr.mxu0 0.0
        %1526 = vmatpush2.msra.mxu0 0.0
        %1527 = vmatprep.subr.mxu0 0.0
        %1528 = vmatpush2.msra.mxu0 0.0
        %1529 = vmatprep.subr.mxu0 0.0
        %1530 = vmatpush2.msra.mxu0 0.0
        %1531 = vmatprep.subr.mxu0 0.0
        %1532 = vmatpush2.msra.mxu0 0.0
        %1533 = vmatprep.subr.mxu0 0.0
        %1534 = vmatpush2.msra.mxu0 0.0
        %1535 = vmatprep.subr.mxu0 0.0
        %1536 = vmatpush2.msra.mxu0 0.0
        %1537 = vmatprep.subr.mxu0 0.0
        %1538 = vmatpush2.msra.mxu0 0.0
        %1539 = vmatprep.subr.mxu0 0.0
        %1540 = vmatpush2.msra.mxu0 0.0
        %1541 = vmatprep.subr.mxu0 0.0
        %1542 = vmatpush2.msra.mxu0 0.0
        %1543 = vmatprep.subr.mxu0 0.0
        %1544 = vmatpush2.msra.mxu0 0.0
        %1545 = vmatprep.subr.mxu0 0.0
        %1546 = vmatpush2.msra.mxu0 0.0
        %1547 = vmatprep.subr.mxu0 0.0
        %1548 = vmatpush2.msra.mxu0 0.0
        %1549 = vmatprep.subr.mxu0 0.0
        %1550 = vmatpush2.msra.mxu0 0.0
        %1551 = vmatprep.subr.mxu0 0.0
        %1552 = vmatpush2.msra.mxu0 0.0
        %1553 = vmatprep.mubr.f32.mxu0 0.0
        %1554 = vmatmul.mubr.f32.gmra.mxu0 %v1454
        %v1555 = vpop.f32.mrf.mxu0
        %v1556 = vadd.f32 %v1452, %v1555
        %v1557 = vpop.f32.mrf.mxu0
        %1558 = vmatprep.mubr.f32.mxu0 0.0
        %1559 = vmatmul.mubr.f32.gmra.mxu0 %v1456
        %v1560 = vpop.f32.mrf.mxu0
        %v1561 = vadd.f32 %v1452, %v1560
        %v1562 = vpop.f32.mrf.mxu0
        %1563 = vmatprep.mubr.f32.mxu0 0.0
        %1564 = vmatmul.mubr.f32.gmra.mxu0 %v1458
        %v1565 = vpop.f32.mrf.mxu0
        %v1566 = vadd.f32 %v1452, %v1565
        %v1567 = vpop.f32.mrf.mxu0
        %1568 = vmatprep.mubr.f32.mxu0 0.0
        %1569 = vmatmul.mubr.f32.gmra.mxu0 %v1460
        %v1570 = vpop.f32.mrf.mxu0
        %v1571 = vadd.f32 %v1452, %v1570
        %v1572 = vpop.f32.mrf.mxu0
        %1573 = vmatprep.mubr.f32.mxu0 0.0
        %1574 = vmatmul.mubr.f32.gmra.mxu0 %v1462
        %v1575 = vpop.f32.mrf.mxu0
        %v1576 = vadd.f32 %v1452, %v1575
        %v1577 = vpop.f32.mrf.mxu0
        %1578 = vmatprep.mubr.f32.mxu0 0.0
        %1579 = vmatmul.mubr.f32.gmra.mxu0 %v1464
        %v1580 = vpop.f32.mrf.mxu0
        %v1581 = vadd.f32 %v1452, %v1580
        %v1582 = vpop.f32.mrf.mxu0
        %1583 = vmatprep.mubr.f32.mxu0 0.0
        %1584 = vmatmul.mubr.f32.gmra.mxu0 %v1466
        %v1585 = vpop.f32.mrf.mxu0
        %v1586 = vadd.f32 %v1452, %v1585
        %v1587 = vpop.f32.mrf.mxu0
        %1588 = vmatprep.mubr.f32.mxu0 0.0
        %1589 = vmatmul.mubr.f32.gmra.mxu0 %v1468
        %v1590 = vpop.f32.mrf.mxu0
        %v1591 = vadd.f32 %v1452, %v1590
        %v1592 = vpop.f32.mrf.mxu0
        %1593 = vmatprep.mubr.f32.mxu0 0.0
        %1594 = vmatmul.mubr.f32.gmra.mxu0 %v1470
        %v1595 = vpop.f32.mrf.mxu0
        %v1596 = vadd.f32 %v1452, %v1595
        %v1597 = vpop.f32.mrf.mxu0
        %1598 = vmatprep.mubr.f32.mxu0 0.0
        %1599 = vmatmul.mubr.f32.gmra.mxu0 %v1472
        %v1600 = vpop.f32.mrf.mxu0
        %v1601 = vadd.f32 %v1452, %v1600
        %v1602 = vpop.f32.mrf.mxu0
        %1603 = vmatprep.mubr.f32.mxu0 0.0
        %1604 = vmatmul.mubr.f32.gmra.mxu0 %v1474
        %v1605 = vpop.f32.mrf.mxu0
        %v1606 = vadd.f32 %v1452, %v1605
        %v1607 = vpop.f32.mrf.mxu0
        %1608 = vmatprep.mubr.f32.mxu0 0.0
        %1609 = vmatmul.mubr.f32.gmra.mxu0 %v1476
        %v1610 = vpop.f32.mrf.mxu0
        %v1611 = vadd.f32 %v1452, %v1610
        %v1612 = vpop.f32.mrf.mxu0
        %1613 = vmatprep.mubr.f32.mxu0 0.0
        %1614 = vmatmul.mubr.f32.gmra.mxu0 %v1478
        %v1615 = vpop.f32.mrf.mxu0
        %v1616 = vadd.f32 %v1452, %v1615
        %v1617 = vpop.f32.mrf.mxu0
        %1618 = vmatprep.mubr.f32.mxu0 0.0
        %1619 = vmatmul.mubr.f32.gmra.mxu0 %v1480
        %v1620 = vpop.f32.mrf.mxu0
        %v1621 = vadd.f32 %v1452, %v1620
        %v1622 = vpop.f32.mrf.mxu0
        %1623 = vmatprep.mubr.f32.mxu0 0.0
        %1624 = vmatmul.mubr.f32.gmra.mxu0 %v1482
        %v1625 = vpop.f32.mrf.mxu0
        %v1626 = vadd.f32 %v1452, %v1625
        %v1627 = vpop.f32.mrf.mxu0
        %1628 = vmatprep.mubr.f32.mxu0 0.0
        %1629 = vmatmul.mubr.f32.gmra.mxu0 %v1484
        %v1630 = vpop.f32.mrf.mxu0
        %v1631 = vadd.f32 %v1452, %v1630
        %v1632 = vpop.f32.mrf.mxu0
        %1633 = vdwg.mxu0
        %v1634 = vld [vmem:[%s5] sm:$0x3]
        %v1635 = vunpack.c.l.bf16 %v1634
        %v1636 = vlaneseq
        %v1637 = vshrl.u32 %v1636, 7
        %v1638 = vsub.s32 0, %v1637
        %v1639 = vrot.slane %v1446, %v1638
        %v1641 = vsel %vm1453, %v1365, 0
        %v1644 = vsel %vm1453, %v1366, 0
        %v1647 = vsel %vm1453, %v1367, 0
        %v1650 = vsel %vm1453, %v1368, 0
        %v1653 = vsel %vm1453, %v1369, 0
        %v1656 = vsel %vm1453, %v1370, 0
        %v1659 = vsel %vm1453, %v1371, 0
        %v1662 = vsel %vm1453, %v1372, 0
        %v1665 = vsel %vm1453, %v1373, 0
        %v1668 = vsel %vm1453, %v1374, 0
        %v1671 = vsel %vm1453, %v1375, 0
        %v1674 = vsel %vm1453, %v1376, 0
        %v1677 = vsel %vm1453, %v1377, 0
        %v1680 = vsel %vm1453, %v1378, 0
        %v1683 = vsel %vm1453, %v1379, 0
        %v1686 = vsel %vm1453, %v1380, 0
        %v1689 = vsel %vm734, %v1635, 0
        %1691 = vmatprep.subr.mxu0 0.0
        %1692 = vmatpush1.msra.mxu0 0.0
        %1693 = vmatprep.subr.mxu0 0.0
        %1694 = vmatpush1.msra.mxu0 0.0
        %1695 = vmatprep.subr.mxu0 0.0
        %1696 = vmatpush1.msra.mxu0 0.0
        %1697 = vmatprep.subr.mxu0 0.0
        %1698 = vmatpush1.msra.mxu0 0.0
        %1699 = vmatprep.subr.mxu0 0.0
        %1700 = vmatpush1.msra.mxu0 0.0
        %1701 = vmatprep.subr.mxu0 0.0
        %1702 = vmatpush1.msra.mxu0 0.0
        %1703 = vmatprep.subr.mxu0 0.0
        %1704 = vmatpush1.msra.mxu0 0.0
        %1705 = vmatprep.subr.mxu0 0.0
        %1706 = vmatpush1.msra.mxu0 0.0
        %1707 = vmatprep.subr.mxu0 0.0
        %1708 = vmatpush1.msra.mxu0 0.0
        %1709 = vmatprep.subr.mxu0 0.0
        %1710 = vmatpush1.msra.mxu0 0.0
        %1711 = vmatprep.subr.mxu0 0.0
        %1712 = vmatpush1.msra.mxu0 0.0
        %1713 = vmatprep.subr.mxu0 0.0
        %1714 = vmatpush1.msra.mxu0 0.0
        %1715 = vmatprep.subr.mxu0 0.0
        %1716 = vmatpush1.msra.mxu0 0.0
        %1717 = vmatprep.subr.mxu0 0.0
        %1718 = vmatpush1.msra.mxu0 0.0
        %1719 = vmatprep.subr.mxu0 0.0
        %1720 = vmatpush1.msra.mxu0 0.0
        %1721 = vmatprep.subr.mxu0 0.0
        %1722 = vmatpush1.msra.mxu0 %v1689
        %1723 = vmatprep.subr.mxu0 0.0
        %1724 = vmatpush2.msra.mxu0 0.0
        %1725 = vmatprep.subr.mxu0 0.0
        %1726 = vmatpush2.msra.mxu0 0.0
        %1727 = vmatprep.subr.mxu0 0.0
        %1728 = vmatpush2.msra.mxu0 0.0
        %1729 = vmatprep.subr.mxu0 0.0
        %1730 = vmatpush2.msra.mxu0 0.0
        %1731 = vmatprep.subr.mxu0 0.0
        %1732 = vmatpush2.msra.mxu0 0.0
        %1733 = vmatprep.subr.mxu0 0.0
        %1734 = vmatpush2.msra.mxu0 0.0
        %1735 = vmatprep.subr.mxu0 0.0
        %1736 = vmatpush2.msra.mxu0 0.0
        %1737 = vmatprep.subr.mxu0 0.0
        %1738 = vmatpush2.msra.mxu0 0.0
        %1739 = vmatprep.subr.mxu0 0.0
        %1740 = vmatpush2.msra.mxu0 0.0
        %1741 = vmatprep.subr.mxu0 0.0
        %1742 = vmatpush2.msra.mxu0 0.0
        %1743 = vmatprep.subr.mxu0 0.0
        %1744 = vmatpush2.msra.mxu0 0.0
        %1745 = vmatprep.subr.mxu0 0.0
        %1746 = vmatpush2.msra.mxu0 0.0
        %1747 = vmatprep.subr.mxu0 0.0
        %1748 = vmatpush2.msra.mxu0 0.0
        %1749 = vmatprep.subr.mxu0 0.0
        %1750 = vmatpush2.msra.mxu0 0.0
        %1751 = vmatprep.subr.mxu0 0.0
        %1752 = vmatpush2.msra.mxu0 0.0
        %1753 = vmatprep.subr.mxu0 0.0
        %1754 = vmatpush2.msra.mxu0 0.0
        %1755 = vmatprep.mubr.f32.mxu0 0.0
        %1756 = vmatmul.mubr.f32.gmra.mxu0 %v1641
        %v1757 = vpop.f32.mrf.mxu0
        %v1758 = vadd.f32 %v1639, %v1757
        %v1759 = vpop.f32.mrf.mxu0
        %1760 = vmatprep.mubr.f32.mxu0 0.0
        %1761 = vmatmul.mubr.f32.gmra.mxu0 %v1644
        %v1762 = vpop.f32.mrf.mxu0
        %v1763 = vadd.f32 %v1639, %v1762
        %v1764 = vpop.f32.mrf.mxu0
        %1765 = vmatprep.mubr.f32.mxu0 0.0
        %1766 = vmatmul.mubr.f32.gmra.mxu0 %v1647
        %v1767 = vpop.f32.mrf.mxu0
        %v1768 = vadd.f32 %v1639, %v1767
        %v1769 = vpop.f32.mrf.mxu0
        %1770 = vmatprep.mubr.f32.mxu0 0.0
        %1771 = vmatmul.mubr.f32.gmra.mxu0 %v1650
        %v1772 = vpop.f32.mrf.mxu0
        %v1773 = vadd.f32 %v1639, %v1772
        %v1774 = vpop.f32.mrf.mxu0
        %1775 = vmatprep.mubr.f32.mxu0 0.0
        %1776 = vmatmul.mubr.f32.gmra.mxu0 %v1653
        %v1777 = vpop.f32.mrf.mxu0
        %v1778 = vadd.f32 %v1639, %v1777
        %v1779 = vpop.f32.mrf.mxu0
        %1780 = vmatprep.mubr.f32.mxu0 0.0
        %1781 = vmatmul.mubr.f32.gmra.mxu0 %v1656
        %v1782 = vpop.f32.mrf.mxu0
        %v1783 = vadd.f32 %v1639, %v1782
        %v1784 = vpop.f32.mrf.mxu0
        %1785 = vmatprep.mubr.f32.mxu0 0.0
        %1786 = vmatmul.mubr.f32.gmra.mxu0 %v1659
        %v1787 = vpop.f32.mrf.mxu0
        %v1788 = vadd.f32 %v1639, %v1787
        %v1789 = vpop.f32.mrf.mxu0
        %1790 = vmatprep.mubr.f32.mxu0 0.0
        %1791 = vmatmul.mubr.f32.gmra.mxu0 %v1662
        %v1792 = vpop.f32.mrf.mxu0
        %v1793 = vadd.f32 %v1639, %v1792
        %v1794 = vpop.f32.mrf.mxu0
        %1795 = vmatprep.mubr.f32.mxu0 0.0
        %1796 = vmatmul.mubr.f32.gmra.mxu0 %v1665
        %v1797 = vpop.f32.mrf.mxu0
        %v1798 = vadd.f32 %v1639, %v1797
        %v1799 = vpop.f32.mrf.mxu0
        %1800 = vmatprep.mubr.f32.mxu0 0.0
        %1801 = vmatmul.mubr.f32.gmra.mxu0 %v1668
        %v1802 = vpop.f32.mrf.mxu0
        %v1803 = vadd.f32 %v1639, %v1802
        %v1804 = vpop.f32.mrf.mxu0
        %1805 = vmatprep.mubr.f32.mxu0 0.0
        %1806 = vmatmul.mubr.f32.gmra.mxu0 %v1671
        %v1807 = vpop.f32.mrf.mxu0
        %v1808 = vadd.f32 %v1639, %v1807
        %v1809 = vpop.f32.mrf.mxu0
        %1810 = vmatprep.mubr.f32.mxu0 0.0
        %1811 = vmatmul.mubr.f32.gmra.mxu0 %v1674
        %v1812 = vpop.f32.mrf.mxu0
        %v1813 = vadd.f32 %v1639, %v1812
        %v1814 = vpop.f32.mrf.mxu0
        %1815 = vmatprep.mubr.f32.mxu0 0.0
        %1816 = vmatmul.mubr.f32.gmra.mxu0 %v1677
        %v1817 = vpop.f32.mrf.mxu0
        %v1818 = vadd.f32 %v1639, %v1817
        %v1819 = vpop.f32.mrf.mxu0
        %1820 = vmatprep.mubr.f32.mxu0 0.0
        %1821 = vmatmul.mubr.f32.gmra.mxu0 %v1680
        %v1822 = vpop.f32.mrf.mxu0
        %v1823 = vadd.f32 %v1639, %v1822
        %v1824 = vpop.f32.mrf.mxu0
        %1825 = vmatprep.mubr.f32.mxu0 0.0
        %1826 = vmatmul.mubr.f32.gmra.mxu0 %v1683
        %v1827 = vpop.f32.mrf.mxu0
        %v1828 = vadd.f32 %v1639, %v1827
        %v1829 = vpop.f32.mrf.mxu0
        %1830 = vmatprep.mubr.f32.mxu0 0.0
        %1831 = vmatmul.mubr.f32.gmra.mxu0 %v1686
        %v1832 = vpop.f32.mrf.mxu0
        %v1833 = vadd.f32 %v1639, %v1832
        %v1834 = vpop.f32.mrf.mxu0
        %1835 = vdwg.mxu0
        %v1836 = vmax.f32 %v1556, 0.0
        %v1837 = vmax.f32 %v1561, 0.0
        %v1838 = vmax.f32 %v1566, 0.0
        %v1839 = vmax.f32 %v1571, 0.0
        %v1840 = vmax.f32 %v1576, 0.0
        %v1841 = vmax.f32 %v1581, 0.0
        %v1842 = vmax.f32 %v1586, 0.0
        %v1843 = vmax.f32 %v1591, 0.0
        %v1844 = vmax.f32 %v1596, 0.0
        %v1845 = vmax.f32 %v1601, 0.0
        %v1846 = vmax.f32 %v1606, 0.0
        %v1847 = vmax.f32 %v1611, 0.0
        %v1848 = vmax.f32 %v1616, 0.0
        %v1849 = vmax.f32 %v1621, 0.0
        %v1850 = vmax.f32 %v1626, 0.0
        %v1851 = vmax.f32 %v1631, 0.0
        %v1852 = vmax.f32 %v1758, 0.0
        %v1853 = vmax.f32 %v1763, 0.0
        %v1854 = vmax.f32 %v1768, 0.0
        %v1855 = vmax.f32 %v1773, 0.0
        %v1856 = vmax.f32 %v1778, 0.0
        %v1857 = vmax.f32 %v1783, 0.0
        %v1858 = vmax.f32 %v1788, 0.0
        %v1859 = vmax.f32 %v1793, 0.0
        %v1860 = vmax.f32 %v1798, 0.0
        %v1861 = vmax.f32 %v1803, 0.0
        %v1862 = vmax.f32 %v1808, 0.0
        %v1863 = vmax.f32 %v1813, 0.0
        %v1864 = vmax.f32 %v1818, 0.0
        %v1865 = vmax.f32 %v1823, 0.0
        %v1866 = vmax.f32 %v1828, 0.0
        %v1867 = vmax.f32 %v1833, 0.0
        %1884 = vrot.lane.b32.xlu0 %v1852, 8
        %v1885 = vpop.permute.xlu0 %1884
        %1886 = vrot.lane.b32.xlu0 %v1853, 8
        %v1887 = vpop.permute.xlu0 %1886
        %1888 = vrot.lane.b32.xlu0 %v1854, 8
        %v1889 = vpop.permute.xlu0 %1888
        %1890 = vrot.lane.b32.xlu0 %v1855, 8
        %v1891 = vpop.permute.xlu0 %1890
        %1892 = vrot.lane.b32.xlu0 %v1856, 8
        %v1893 = vpop.permute.xlu0 %1892
        %1894 = vrot.lane.b32.xlu0 %v1857, 8
        %v1895 = vpop.permute.xlu0 %1894
        %1896 = vrot.lane.b32.xlu0 %v1858, 8
        %v1897 = vpop.permute.xlu0 %1896
        %1898 = vrot.lane.b32.xlu0 %v1859, 8
        %v1899 = vpop.permute.xlu0 %1898
        %1900 = vrot.lane.b32.xlu0 %v1860, 8
        %v1901 = vpop.permute.xlu0 %1900
        %1902 = vrot.lane.b32.xlu0 %v1861, 8
        %v1903 = vpop.permute.xlu0 %1902
        %1904 = vrot.lane.b32.xlu0 %v1862, 8
        %v1905 = vpop.permute.xlu0 %1904
        %1906 = vrot.lane.b32.xlu0 %v1863, 8
        %v1907 = vpop.permute.xlu0 %1906
        %1908 = vrot.lane.b32.xlu0 %v1864, 8
        %v1909 = vpop.permute.xlu0 %1908
        %1910 = vrot.lane.b32.xlu0 %v1865, 8
        %v1911 = vpop.permute.xlu0 %1910
        %1912 = vrot.lane.b32.xlu0 %v1866, 8
        %v1913 = vpop.permute.xlu0 %1912
        %1914 = vrot.lane.b32.xlu0 %v1867, 8
        %v1915 = vpop.permute.xlu0 %1914
        %vm1932 = vcmask 64512
        %v1933 = vsel %vm1932, %v1836, %v1885
        %v1934 = vsel %vm1932, %v1837, %v1887
        %v1935 = vsel %vm1932, %v1838, %v1889
        %v1936 = vsel %vm1932, %v1839, %v1891
        %v1937 = vsel %vm1932, %v1840, %v1893
        %v1938 = vsel %vm1932, %v1841, %v1895
        %v1939 = vsel %vm1932, %v1842, %v1897
        %v1940 = vsel %vm1932, %v1843, %v1899
        %v1941 = vsel %vm1932, %v1844, %v1901
        %v1942 = vsel %vm1932, %v1845, %v1903
        %v1943 = vsel %vm1932, %v1846, %v1905
        %v1944 = vsel %vm1932, %v1847, %v1907
        %v1945 = vsel %vm1932, %v1848, %v1909
        %v1946 = vsel %vm1932, %v1849, %v1911
        %v1947 = vsel %vm1932, %v1850, %v1913
        %v1948 = vsel %vm1932, %v1851, %v1915
        %v1949 = vld [vmem:[%s6] sm:$0xf]
        %v1950 = vld [vmem:[%s6 + $0x4] sm:$0xf]
        %v1951 = vunpack.c.l.bf16 %v1949
        %v1952 = vunpack.c.l.bf16 %v1950
        %v1953 = vld [vmem:[%s409] sm:$0x1]
        %v1955 = vlaneseq
        %v1956 = vshrl.u32 %v1955, 7
        %v1957 = vsub.s32 0, %v1956
        %v1958 = vrot.slane %v1953, %v1957
        %vm1960 = vcmask 130048
        %v1962 = vsel %vm1960, %v1933, 0
        %v1965 = vsel %vm1960, %v1934, 0
        %v1968 = vsel %vm1960, %v1935, 0
        %v1971 = vsel %vm1960, %v1936, 0
        %v1974 = vsel %vm1960, %v1937, 0
        %v1977 = vsel %vm1960, %v1938, 0
        %v1980 = vsel %vm1960, %v1939, 0
        %v1983 = vsel %vm1960, %v1940, 0
        %v1986 = vsel %vm1960, %v1941, 0
        %v1989 = vsel %vm1960, %v1942, 0
        %v1992 = vsel %vm1960, %v1943, 0
        %v1995 = vsel %vm1960, %v1944, 0
        %v1998 = vsel %vm1960, %v1945, 0
        %v2001 = vsel %vm1960, %v1946, 0
        %v2004 = vsel %vm1960, %v1947, 0
        %v2007 = vsel %vm1960, %v1948, 0
        %2009 = vmatprep.subr.mxu0 0.0
        %2010 = vmatpush1.msra.mxu0 0.0
        %2011 = vmatprep.subr.mxu0 0.0
        %2012 = vmatpush1.msra.mxu0 0.0
        %2013 = vmatprep.subr.mxu0 0.0
        %2014 = vmatpush1.msra.mxu0 0.0
        %2015 = vmatprep.subr.mxu0 0.0
        %2016 = vmatpush1.msra.mxu0 0.0
        %2017 = vmatprep.subr.mxu0 0.0
        %2018 = vmatpush1.msra.mxu0 0.0
        %2019 = vmatprep.subr.mxu0 0.0
        %2020 = vmatpush1.msra.mxu0 0.0
        %2021 = vmatprep.subr.mxu0 0.0
        %2022 = vmatpush1.msra.mxu0 0.0
        %2023 = vmatprep.subr.mxu0 0.0
        %2024 = vmatpush1.msra.mxu0 0.0
        %2025 = vmatprep.subr.mxu0 0.0
        %2026 = vmatpush1.msra.mxu0 0.0
        %2027 = vmatprep.subr.mxu0 0.0
        %2028 = vmatpush1.msra.mxu0 0.0
        %2029 = vmatprep.subr.mxu0 0.0
        %2030 = vmatpush1.msra.mxu0 0.0
        %2031 = vmatprep.subr.mxu0 0.0
        %2032 = vmatpush1.msra.mxu0 0.0
        %2033 = vmatprep.subr.mxu0 0.0
        %2034 = vmatpush1.msra.mxu0 0.0
        %2035 = vmatprep.subr.mxu0 0.0
        %2036 = vmatpush1.msra.mxu0 0.0
        %2037 = vmatprep.subr.mxu0 0.0
        %2038 = vmatpush1.msra.mxu0 %v1952
        %2039 = vmatprep.subr.mxu0 0.0
        %2040 = vmatpush1.msra.mxu0 %v1951
        %2041 = vmatprep.subr.mxu0 0.0
        %2042 = vmatpush2.msra.mxu0 0.0
        %2043 = vmatprep.subr.mxu0 0.0
        %2044 = vmatpush2.msra.mxu0 0.0
        %2045 = vmatprep.subr.mxu0 0.0
        %2046 = vmatpush2.msra.mxu0 0.0
        %2047 = vmatprep.subr.mxu0 0.0
        %2048 = vmatpush2.msra.mxu0 0.0
        %2049 = vmatprep.subr.mxu0 0.0
        %2050 = vmatpush2.msra.mxu0 0.0
        %2051 = vmatprep.subr.mxu0 0.0
        %2052 = vmatpush2.msra.mxu0 0.0
        %2053 = vmatprep.subr.mxu0 0.0
        %2054 = vmatpush2.msra.mxu0 0.0
        %2055 = vmatprep.subr.mxu0 0.0
        %2056 = vmatpush2.msra.mxu0 0.0
        %2057 = vmatprep.subr.mxu0 0.0
        %2058 = vmatpush2.msra.mxu0 0.0
        %2059 = vmatprep.subr.mxu0 0.0
        %2060 = vmatpush2.msra.mxu0 0.0
        %2061 = vmatprep.subr.mxu0 0.0
        %2062 = vmatpush2.msra.mxu0 0.0
        %2063 = vmatprep.subr.mxu0 0.0
        %2064 = vmatpush2.msra.mxu0 0.0
        %2065 = vmatprep.subr.mxu0 0.0
        %2066 = vmatpush2.msra.mxu0 0.0
        %2067 = vmatprep.subr.mxu0 0.0
        %2068 = vmatpush2.msra.mxu0 0.0
        %2069 = vmatprep.subr.mxu0 0.0
        %2070 = vmatpush2.msra.mxu0 0.0
        %2071 = vmatprep.subr.mxu0 0.0
        %2072 = vmatpush2.msra.mxu0 0.0
        %2073 = vmatprep.mubr.f32.mxu0 0.0
        %2074 = vmatmul.mubr.f32.gmra.mxu0 %v1962
        %v2075 = vpop.f32.mrf.mxu0
        %v2076 = vadd.f32 %v1958, %v2075
        %v2077 = vpop.f32.mrf.mxu0
        %2078 = vmatprep.mubr.f32.mxu0 0.0
        %2079 = vmatmul.mubr.f32.gmra.mxu0 %v1965
        %v2080 = vpop.f32.mrf.mxu0
        %v2081 = vadd.f32 %v1958, %v2080
        %v2082 = vpop.f32.mrf.mxu0
        %2083 = vmatprep.mubr.f32.mxu0 0.0
        %2084 = vmatmul.mubr.f32.gmra.mxu0 %v1968
        %v2085 = vpop.f32.mrf.mxu0
        %v2086 = vadd.f32 %v1958, %v2085
        %v2087 = vpop.f32.mrf.mxu0
        %2088 = vmatprep.mubr.f32.mxu0 0.0
        %2089 = vmatmul.mubr.f32.gmra.mxu0 %v1971
        %v2090 = vpop.f32.mrf.mxu0
        %v2091 = vadd.f32 %v1958, %v2090
        %v2092 = vpop.f32.mrf.mxu0
        %2093 = vmatprep.mubr.f32.mxu0 0.0
        %2094 = vmatmul.mubr.f32.gmra.mxu0 %v1974
        %v2095 = vpop.f32.mrf.mxu0
        %v2096 = vadd.f32 %v1958, %v2095
        %v2097 = vpop.f32.mrf.mxu0
        %2098 = vmatprep.mubr.f32.mxu0 0.0
        %2099 = vmatmul.mubr.f32.gmra.mxu0 %v1977
        %v2100 = vpop.f32.mrf.mxu0
        %v2101 = vadd.f32 %v1958, %v2100
        %v2102 = vpop.f32.mrf.mxu0
        %2103 = vmatprep.mubr.f32.mxu0 0.0
        %2104 = vmatmul.mubr.f32.gmra.mxu0 %v1980
        %v2105 = vpop.f32.mrf.mxu0
        %v2106 = vadd.f32 %v1958, %v2105
        %v2107 = vpop.f32.mrf.mxu0
        %2108 = vmatprep.mubr.f32.mxu0 0.0
        %2109 = vmatmul.mubr.f32.gmra.mxu0 %v1983
        %v2110 = vpop.f32.mrf.mxu0
        %v2111 = vadd.f32 %v1958, %v2110
        %v2112 = vpop.f32.mrf.mxu0
        %2113 = vmatprep.mubr.f32.mxu0 0.0
        %2114 = vmatmul.mubr.f32.gmra.mxu0 %v1986
        %v2115 = vpop.f32.mrf.mxu0
        %v2116 = vadd.f32 %v1958, %v2115
        %v2117 = vpop.f32.mrf.mxu0
        %2118 = vmatprep.mubr.f32.mxu0 0.0
        %2119 = vmatmul.mubr.f32.gmra.mxu0 %v1989
        %v2120 = vpop.f32.mrf.mxu0
        %v2121 = vadd.f32 %v1958, %v2120
        %v2122 = vpop.f32.mrf.mxu0
        %2123 = vmatprep.mubr.f32.mxu0 0.0
        %2124 = vmatmul.mubr.f32.gmra.mxu0 %v1992
        %v2125 = vpop.f32.mrf.mxu0
        %v2126 = vadd.f32 %v1958, %v2125
        %v2127 = vpop.f32.mrf.mxu0
        %2128 = vmatprep.mubr.f32.mxu0 0.0
        %2129 = vmatmul.mubr.f32.gmra.mxu0 %v1995
        %v2130 = vpop.f32.mrf.mxu0
        %v2131 = vadd.f32 %v1958, %v2130
        %v2132 = vpop.f32.mrf.mxu0
        %2133 = vmatprep.mubr.f32.mxu0 0.0
        %2134 = vmatmul.mubr.f32.gmra.mxu0 %v1998
        %v2135 = vpop.f32.mrf.mxu0
        %v2136 = vadd.f32 %v1958, %v2135
        %v2137 = vpop.f32.mrf.mxu0
        %2138 = vmatprep.mubr.f32.mxu0 0.0
        %2139 = vmatmul.mubr.f32.gmra.mxu0 %v2001
        %v2140 = vpop.f32.mrf.mxu0
        %v2141 = vadd.f32 %v1958, %v2140
        %v2142 = vpop.f32.mrf.mxu0
        %2143 = vmatprep.mubr.f32.mxu0 0.0
        %2144 = vmatmul.mubr.f32.gmra.mxu0 %v2004
        %v2145 = vpop.f32.mrf.mxu0
        %v2146 = vadd.f32 %v1958, %v2145
        %v2147 = vpop.f32.mrf.mxu0
        %2148 = vmatprep.mubr.f32.mxu0 0.0
        %2149 = vmatmul.mubr.f32.gmra.mxu0 %v2007
        %v2150 = vpop.f32.mrf.mxu0
        %v2151 = vadd.f32 %v1958, %v2150
        %v2152 = vpop.f32.mrf.mxu0
        %2153 = vdwg.mxu0
        %2154 = vxpose.xlu0.b32.start [1/16] %v2076, 128
        %2155 = vxpose.xlu0.b32.cont [2/16] %v2081, 128
        %2156 = vxpose.xlu0.b32.cont [3/16] %v2086, 128
        %2157 = vxpose.xlu0.b32.cont [4/16] %v2091, 128
        %2158 = vxpose.xlu0.b32.cont [5/16] %v2096, 128
        %2159 = vxpose.xlu0.b32.cont [6/16] %v2101, 128
        %2160 = vxpose.xlu0.b32.cont [7/16] %v2106, 128
        %2161 = vxpose.xlu0.b32.cont [8/16] %v2111, 128
        %2162 = vxpose.xlu0.b32.cont [9/16] %v2116, 128
        %2163 = vxpose.xlu0.b32.cont [10/16] %v2121, 128
        %2164 = vxpose.xlu0.b32.cont [11/16] %v2126, 128
        %2165 = vxpose.xlu0.b32.cont [12/16] %v2131, 128
        %2166 = vxpose.xlu0.b32.cont [13/16] %v2136, 128
        %2167 = vxpose.xlu0.b32.cont [14/16] %v2141, 128
        %2168 = vxpose.xlu0.b32.cont [15/16] %v2146, 128
        %2169 = vxpose.xlu0.b32.end [16/16] %v2151, 128
        %v2170 = vpop.trf.xlu0
        %v2171 = vpop.trf.xlu0
        %v2172 = vpop.trf.xlu0
        %v2173 = vpop.trf.xlu0
        %v2174 = vpop.trf.xlu0
        %v2175 = vpop.trf.xlu0
        %v2176 = vpop.trf.xlu0
        %v2177 = vpop.trf.xlu0
        %v2178 = vpop.trf.xlu0
        %v2179 = vpop.trf.xlu0
        %v2180 = vpop.trf.xlu0
        %v2181 = vpop.trf.xlu0
        %v2182 = vpop.trf.xlu0
        %v2183 = vpop.trf.xlu0
        %v2184 = vpop.trf.xlu0
        %v2185 = vpop.trf.xlu0
        %2186 = vst [vmem:[%s376] sm:$0xff] %v2170
        %s2187 = sand.u32 %s233, 1
        %s2188 = scalar_lea.sflag [#allocation3], %s2187
        %s2189 = sand.u32 %s233, 1
        %s2190 = smul.addr %s2189, 8
        %s2191 = scalar_lea.vmem [#allocation2], %s2190
        // Predicated region
        $region53: #{tpu_custom_call.1} parent=51 // pred_check
          %p2192 = pneg %p243
        $region54: #{tpu_custom_call.1} parent=51 // pred_check_branch
          %2194 = sbr.rel (%p2192) target = $region56
        $region55: #{tpu_custom_call.1} parent=51 // pred_region
          %s2196 = ssub.s32 128, 128
          %2197 = vsyncadd %s2188, %s2196
          %s2198 = smul.addr %s26, 2
          %s2199 = sadd.s32 %s27, %s2198
          %s2200 = smul.addr %s2199, 128
          %s2201 = scalar_lea.hbm %s8, %s2200
          %s2203 = sshll.u32 %s2191, 4
          %s2204 = int_to_ptr.vmem [resolvable:$true] %s2203
          %2206 = dma.vmem_to_hbm [thread:$0]  %s2204, 128, %s2201, %s2188
        $region56: #{tpu_custom_call.1} parent=51 // pred_fallthru
          _
      $region52: #{tpu_custom_call.1} parent=5 // pred_fallthru
        _
      %p2207 = scmp.le.s32.totalorder 2, %s17
      // Predicated region
      $region57: #{tpu_custom_call.1} parent=5 // pred_check
        %p2208 = pneg %p2207
      $region58: #{tpu_custom_call.1} parent=5 // pred_check_branch
        %2210 = sbr.rel (%p2208) target = $region60
      $region59: #{tpu_custom_call.1} parent=5 // pred_region
        %s2211 = ssub.s32 %s17, 2
        // Predicated region
        $region61: #{tpu_custom_call.1} parent=59 // pred_check
          %p2212 = pneg %p249
        $region62: #{tpu_custom_call.1} parent=59 // pred_check_branch
          %2214 = sbr.rel (%p2212) target = $region64
        $region63: #{tpu_custom_call.1} parent=59 // pred_region
          %s2215 = sand.u32 %s234, 1
          %s2216 = scalar_lea.sflag [#allocation3], %s2215
          %s2217 = sand.u32 %s234, 1
          %s2218 = smul.addr %s2217, 8
          %s2219 = scalar_lea.vmem [#allocation2], %s2218
          %2220 = dma.done %s2216, 128
        $region64: #{tpu_custom_call.1} parent=59 // pred_fallthru
          _
      $region60: #{tpu_custom_call.1} parent=5 // pred_fallthru
        _
    $region6: #{tpu_custom_call.1} parent=1 // loop_footer
      %s21 = sadd.s32 1, %s17
    $region7: #{tpu_custom_call.1} parent=1 // loop_footer_branch
      %16 = sbr.rel target = $region3
    $region8: #{tpu_custom_call.1} parent=1 // loop_exit
      _
    %2221 = vsyncpa [#allocation3], 1
    %s2222 = scalar_lea.sflag [#allocation3], 1
    %2223 = vsyncpa %s2222, 1

</llo_original>
